<compile_context>
chip_gen: v7x
topology: tpu7x:2x2x1
jax: 0.10.0
libtpu: 0.0.40
codegen_flags: <defaults>
</compile_context>

<pallas_src>
import functools

import jax
import jax.numpy as jnp
from jax import lax
from jax.experimental import pallas as pl
from jax.experimental.pallas import tpu as pltpu

LN_EPS = 1e-5  # torch.nn.LayerNorm default

# dot_general dimension numbers
_NT = (((1,), (1,)), ((), ()))   # A @ B^T  (contract both minor dims)
_TN = (((0,), (0,)), ((), ()))   # A^T @ B  (contract both major dims)


def _layernorm(x, gamma, beta):
    mu = jnp.mean(x, axis=-1, keepdims=True)
    var = jnp.mean((x - mu) ** 2, axis=-1, keepdims=True)
    return (x - mu) * lax.rsqrt(var + LN_EPS) * gamma + beta


def _round_up(x, m):
    return ((x + m - 1) // m) * m


# ---------------------------------------------------------------------------
# Kernel
# ---------------------------------------------------------------------------
def cross_modal_attention_kernel(
    x1_ref, x2_ref,
    wq_ref, wkv_ref, wot_ref, cb_ref, rc_ref,
    o_ref,
    *, num_heads, head_dim,
):
    f32 = jnp.float32
    x1 = x1_ref[...]                               # (Tb, D)
    x2 = x2_ref[...]
    tb, dim = x1.shape
    mm = wq_ref.dtype                              # bf16 by default, f32 optional

    x1m = x1.astype(mm)
    x2m = x2.astype(mm)

    # ---- projections (MXU), produced directly in (feature, rows) layout so
    # the row axis (>=128 at production tiles) is the dense 128-lane axis for
    # all head math.  The softmax `scale` is folded into wq / bq at pack time.
    qT = lax.dot_general(wq_ref[...], x1m, _NT, preferred_element_type=f32)
    qT = qT + cb_ref[:, 0:1]                       # (D, Tb)
    kvT = lax.dot_general(wkv_ref[...], x2m, _NT, preferred_element_type=f32)
    kT = kvT[:dim, :] + cb_ref[:, 1:2]             # (D, Tb)
    vT = kvT[dim:, :] + cb_ref[:, 2:3]             # (D, Tb)

    qh = qT.reshape(num_heads, head_dim, tb)
    kh = kT.reshape(num_heads, head_dim, tb)
    vh = vT.reshape(num_heads, head_dim, tb)

    # ---- scores s[i, j, b]: static loop over head_dim keeps only lane-dense
    # (H, H, Tb) intermediates live (no (Tb, H, H, head_dim) broadcasts).
    s = qh[:, 0, :][:, None, :] * kh[:, 0, :][None, :, :]
    for d in range(1, head_dim):
        s = s + qh[:, d, :][:, None, :] * kh[:, d, :][None, :, :]

    # ---- softmax over the key-head axis (axis=1).  Approximate reciprocal
    # runs on the EUP slot; documented tolerance impact ~1e-3 relative.
    s = s - jnp.max(s, axis=1, keepdims=True)
    p = jnp.exp(s)
    p = p * pl.reciprocal(jnp.sum(p, axis=1, keepdims=True), approx=True)
    # attention dropout: identity in eval mode

    # ---- context ctx[i, d, b] = sum_j p[i, j, b] * vh[j, d, b]
    ctx = p[:, 0, :][:, None, :] * vh[0][None, :, :]
    for j in range(1, num_heads):
        ctx = ctx + p[:, j, :][:, None, :] * vh[j][None, :, :]
    ctxT = ctx.reshape(dim, tb)                    # (D, Tb)

    # ---- output projection back to row layout: (D,Tb)^T @ (D,D) -> (Tb,D)
    out = lax.dot_general(ctxT.astype(mm), wot_ref[...], _TN,
                          preferred_element_type=f32)
    out = out + rc_ref[0:1, :]                     # + bo

    # ---- residual + LayerNorms (always f32; v5e has no bf16 VPU/EUP).
    # NOTE: for dim < 128 the final store is a lane-masked vst; if this ever
    # becomes store-bound on v5e, present the output as a (rows*dim/128, 128)
    # lane-dense slab wrapper-side (layout plumbing only).
    y = _layernorm(x1.astype(f32) + out, rc_ref[1:2, :], rc_ref[2:3, :])
    y = _layernorm(y + y, rc_ref[3:4, :], rc_ref[4:5, :])   # dropout(y)==y eval
    o_ref[...] = y.astype(o_ref.dtype)


# ---------------------------------------------------------------------------
# Parameter packing (PyTorch Linear layout: W is (out, in), b is (dim,))
# ---------------------------------------------------------------------------
def pack_params(params, *, num_heads, matmul_dtype=jnp.bfloat16):
    wq = jnp.asarray(params["wq"], jnp.float32)
    dim = wq.shape[0]
    scale = (dim // num_heads) ** (-0.5)

    def v1(a):
        return jnp.asarray(a, jnp.float32).reshape(-1)

    wq_s = (wq * scale).astype(matmul_dtype)                       # (D, D)  out,in
    wkv = jnp.concatenate([jnp.asarray(params["wk"], jnp.float32),
                           jnp.asarray(params["wv"], jnp.float32)],
                          axis=0).astype(matmul_dtype)             # (2D, D) out,in
    wo_t = jnp.asarray(params["wo"], jnp.float32).T.astype(matmul_dtype)  # (D, D) in,out

    # column biases used in the transposed layout: bq*scale | bk | bv
    cbias = jnp.zeros((dim, 8), jnp.float32)
    cbias = cbias.at[:, 0].set(v1(params["bq"]) * scale)
    cbias = cbias.at[:, 1].set(v1(params["bk"]))
    cbias = cbias.at[:, 2].set(v1(params["bv"]))

    # row constants used in row layout: bo, g1, b1, g2, b2
    rconst = jnp.zeros((8, dim), jnp.float32)
    rconst = rconst.at[0].set(v1(params["bo"]))
    rconst = rconst.at[1].set(v1(params["g1"]))
    rconst = rconst.at[2].set(v1(params["b1"]))
    rconst = rconst.at[3].set(v1(params["g2"]))
    rconst = rconst.at[4].set(v1(params["b2"]))
    return wq_s, wkv, wo_t, cbias, rconst


# ---------------------------------------------------------------------------
# Generation-aware tiling policy
# ---------------------------------------------------------------------------
def _vmem_capacity_bytes():
    try:
        v = getattr(pltpu.get_tpu_info(), "vmem_capacity_bytes", None)
        if v:
            return int(v)
    except Exception:
        pass
    return 64 * 2**20          # conservative (v7x physical VMEM)


def _num_tensorcores():
    try:
        info = pltpu.get_tpu_info()
    except Exception:
        return 1
    for name in ("num_cores", "core_count", "num_tensorcores", "tensorcore_count"):
        v = getattr(info, name, None)
        if isinstance(v, int) and v > 0:
            return v
    return 1


def _per_row_vmem_bytes(dim, num_heads):
    f32 = 4
    head_dim = dim // num_heads
    lane_pad = max(dim, 128)
    dh_pad = max(head_dim, 8)
    # row-layout blocks: x1/x2/out (double-buffered) + residual/LN temporaries
    row_bytes = (3 * 2 + 3) * lane_pad * f32
    # transposed lane-dense activations: qT/kT/vT + kvT + scores/probs + ctx
    tr_bytes = (3 * dim + 2 * dim + 4 * num_heads * num_heads
                + 2 * num_heads * dh_pad) * f32
    return row_bytes + tr_bytes


def _choose_block_rows(batch, dim, num_heads, act_budget_bytes, num_cores):
    per_row = _per_row_vmem_bytes(dim, num_heads)
    cap = max(8, min(act_budget_bytes // per_row, 1024))   # 512-1024 row sweet spot
    cap = (cap // 8) * 8
    if batch <= cap:
        block = _round_up(batch, 8)
    elif cap >= 128:
        block = (cap // 128) * 128      # keep the transposed lane axis dense
    else:
        block = cap
    if num_cores > 1:
        # give every TensorCore at least one equally sized grid step
        per_core = _round_up(pl.cdiv(batch, num_cores), 8)
        block = min(block, max(per_core, 8))
    return max(8, block)


def _cost_estimate(batch, dim, num_heads, weight_bytes):
    head_dim = dim // num_heads
    flops = (2 * batch * dim * dim                       # Q projection
             + 2 * batch * dim * (2 * dim)               # fused K|V projection
             + 2 * batch * dim * dim                     # out projection
             + 4 * batch * num_heads * num_heads * head_dim   # scores + ctx
             + 20 * batch * dim)                         # residual + LayerNorms
    transcendentals = batch * (num_heads * num_heads + num_heads + 2)
    bytes_accessed = 3 * batch * dim * 4 + weight_bytes
    return pl.CostEstimate(flops=flops, transcendentals=transcendentals,
                           bytes_accessed=bytes_accessed)


# ---------------------------------------------------------------------------
# Cached pallas_call builder (one compile per static signature)
# ---------------------------------------------------------------------------
@functools.lru_cache(maxsize=None)
def _build_forward(b_pad, dim, num_heads, block_rows, x_dtype_name, mm_dtype_name,
                   core_parallel, vmem_limit_bytes):
    grid_steps = b_pad // block_rows
    x_dtype = jnp.dtype(x_dtype_name)
    mm_size = jnp.dtype(mm_dtype_name).itemsize
    weight_bytes = 4 * dim * dim * mm_size + (dim * 8 + 8 * dim) * 4

    row_spec = pl.BlockSpec((block_rows, dim), lambda i: (i, 0))

    def const_spec(shape):
        return pl.BlockSpec(shape, lambda i: (0, 0))

    kernel = functools.partial(cross_modal_attention_kernel,
                               num_heads=num_heads,
                               head_dim=dim // num_heads)

    if core_parallel:
        sem = (getattr(pltpu, "CORE_PARALLEL", pltpu.PARALLEL),)
    else:
        sem = (pltpu.PARALLEL,)

    return pl.pallas_call(
        kernel,
        out_shape=jax.ShapeDtypeStruct((b_pad, dim), x_dtype),
        grid_spec=pltpu.PrefetchScalarGridSpec(
            num_scalar_prefetch=0,
            grid=(grid_steps,),
            in_specs=[
                row_spec, row_spec,                          # x1, x2
                const_spec((dim, dim)),                      # scaled Wq (out,in)
                const_spec((2 * dim, dim)),                  # [Wk;Wv]   (out,in)
                const_spec((dim, dim)),                      # Wo^T      (in,out)
                const_spec((dim, 8)),                        # column biases
                const_spec((8, dim)),                        # bo + LN params
            ],
            out_specs=row_spec,
        ),
        compiler_params=pltpu.CompilerParams(
            dimension_semantics=sem,
            vmem_limit_bytes=int(vmem_limit_bytes)),
        cost_estimate=_cost_estimate(b_pad, dim, num_heads, weight_bytes),
    )


# ---------------------------------------------------------------------------
# Public wrapper
# ---------------------------------------------------------------------------
def cross_modal_attention(x1, x2, params, *, num_heads, block_rows=None,
                          matmul_dtype=jnp.bfloat16, core_parallel=None):
    """Forward pass of CrossModalAttention (eval mode).

    matmul_dtype: MXU operand dtype (bfloat16 default on all generations,
    f32 accumulation); element-wise / softmax / LayerNorm math is always f32.
    core_parallel: force CORE_PARALLEL grid semantics (v7x); None = auto.
    """
    # PyTorch-style batch-size reconciliation (torch.Tensor.expand).
    if x1.shape[0] != x2.shape[0]:
        if x1.shape[0] < x2.shape[0]:
            x1 = jnp.broadcast_to(x1, (x2.shape[0],) + x1.shape[1:])
        else:
            x2 = jnp.broadcast_to(x2, (x1.shape[0],) + x2.shape[1:])

    B, dim = x1.shape
    assert dim % num_heads == 0, "dim must be divisible by num_heads"

    packed = pack_params(params, num_heads=num_heads, matmul_dtype=matmul_dtype)

    mm_size = jnp.dtype(matmul_dtype).itemsize
    weight_vmem = 4 * dim * dim * mm_size + (dim * 8 + 8 * dim) * 4
    capacity = _vmem_capacity_bytes()
    vmem_limit = min(capacity * 3 // 4, 100 * 2**20)
    # constants are double-buffered by the pipeline; leave a small margin
    act_budget = max(vmem_limit - 2 * weight_vmem - (4 << 20), 2 << 20)

    num_cores = _num_tensorcores()
    if block_rows is None:
        block_rows = _choose_block_rows(B, dim, num_heads, act_budget, num_cores)
    block_rows = max(8, _round_up(int(block_rows), 8))

    grid_steps = pl.cdiv(B, block_rows)
    b_pad = grid_steps * block_rows
    if core_parallel is None:
        core_parallel = bool(num_cores > 1 and grid_steps >= num_cores
                             and grid_steps % num_cores == 0)

    fwd = _build_forward(b_pad, dim, num_heads, block_rows,
                         jnp.dtype(x1.dtype).name, jnp.dtype(matmul_dtype).name,
                         bool(core_parallel), vmem_limit)

    if b_pad != B:
        pad = ((0, b_pad - B), (0, 0))
        x1 = jnp.pad(x1, pad)
        x2 = jnp.pad(x2, pad)

    out = fwd(x1, x2, *packed)
    return out[:B] if b_pad != B else out


# ---------------------------------------------------------------------------
# Pure-JAX reference (exact math, unfused) for validation
# ---------------------------------------------------------------------------
def reference_forward(x1, x2, params, *, num_heads):
    B, dim = x1.shape
    head_dim = dim // num_heads
    scale = head_dim ** (-0.5)
    q = (x1 @ params["wq"].T + params["bq"]).reshape(B, num_heads, head_dim)
    k = (x2 @ params["wk"].T + params["bk"]).reshape(B, num_heads, head_dim)
    v = (x2 @ params["wv"].T + params["bv"]).reshape(B, num_heads, head_dim)
    attn = jnp.einsum('bhd,bgd->bhg', q, k) * scale
    attn = jax.nn.softmax(attn, axis=-1)
    out = jnp.einsum('bhg,bgd->bhd', attn, v).reshape(B, dim)
    out = out @ params["wo"].T + params["bo"]
    y = _layernorm(x1 + out, params["g1"], params["b1"])
    y = _layernorm(y + y, params["g2"], params["b2"])
    return y


if __name__ == "__main__":
    B, DIM, HEADS = 16, 32, 8

    key = jax.random.PRNGKey(0)
    ks = jax.random.split(key, 12)

    def w(k):   # small deterministic weights, PyTorch (out, in) layout
        return (0.05 * jax.random.normal(k, (DIM, DIM))).astype(jnp.float32)

    def b(k):
        return (0.05 * jax.random.normal(k, (DIM,))).astype(jnp.float32)

    params = {
        "wq": w(ks[0]), "bq": b(ks[1]),
        "wk": w(ks[2]), "bk": b(ks[3]),
        "wv": w(ks[4]), "bv": b(ks[5]),
        "wo": w(ks[6]), "bo": b(ks[7]),
        "g1": (1.0 + 0.1 * jax.random.normal(ks[8], (DIM,))).astype(jnp.float32),
        "b1": (0.05 * jax.random.normal(ks[9], (DIM,))).astype(jnp.float32),
        "g2": jnp.ones((DIM,), jnp.float32),
        "b2": jnp.zeros((DIM,), jnp.float32),
    }

    x1 = jax.random.normal(ks[10], (B, DIM), dtype=jnp.float32)
    x2 = jax.random.normal(ks[11], (B, DIM), dtype=jnp.float32)

    ref = reference_forward(x1, x2, params, num_heads=HEADS)

    # Default path: bf16 matmul operands (native MXU datapath on v5e/v6e/v7x),
    # f32 accumulation + f32 softmax / LayerNorm.
    out = jax.block_until_ready(cross_modal_attention(x1, x2, params, num_heads=HEADS))
    assert out.shape == (B, DIM)
    assert jnp.allclose(out, ref, atol=5e-2, rtol=5e-2), \
        float(jnp.max(jnp.abs(out - ref)))

    # f32 matmul operands + a batch that is not a multiple of the row tile
    # (exercises the padded-batch path).  Tolerance covers the approximate
    # softmax reciprocal (EUP).
    B2 = 20
    x1b = jax.random.normal(ks[10], (B2, DIM), dtype=jnp.float32)
    x2b = jax.random.normal(ks[11], (B2, DIM), dtype=jnp.float32)
    refb = reference_forward(x1b, x2b, params, num_heads=HEADS)
    outb = jax.block_until_ready(
        cross_modal_attention(x1b, x2b, params, num_heads=HEADS,
                              matmul_dtype=jnp.float32))
    assert outb.shape == (B2, DIM)
    assert jnp.allclose(outb, refb, atol=2e-3, rtol=2e-3), \
        float(jnp.max(jnp.abs(outb - refb)))

    print("KERNEL_OK")
</pallas_src>

<mosaic_0001>
module attributes {stable_mosaic.version = 11 : i64} {
  func.func @cross_modal_attention_kernel(%arg0: i32, %arg1: memref<16x32xf32, #tpu.memory_space<vmem>>, %arg2: memref<16x32xf32, #tpu.memory_space<vmem>>, %arg3: memref<32x32xbf16, #tpu.memory_space<vmem>>, %arg4: memref<64x32xbf16, #tpu.memory_space<vmem>>, %arg5: memref<32x32xbf16, #tpu.memory_space<vmem>>, %arg6: memref<32x8xf32, #tpu.memory_space<vmem>>, %arg7: memref<8x32xf32, #tpu.memory_space<vmem>>, %arg8: memref<16x32xf32, #tpu.memory_space<vmem>>) attributes {dimension_semantics = [#tpu.dimension_semantics<parallel>], iteration_bounds = array<i64: 1>, scalar_prefetch = 0 : i64, scratch_operands = 0 : i64, tpu.core_type = #tpu.core_type<tc>, window_params = [{transform_indices = @transform_0, window_bounds = array<i64: 16, 32>}, {transform_indices = @transform_1, window_bounds = array<i64: 16, 32>}, {pipeline_mode = #tpu.pipeline_mode<synchronous>, transform_indices = @transform_2, window_bounds = array<i64: 32, 32>}, {pipeline_mode = #tpu.pipeline_mode<synchronous>, transform_indices = @transform_3, window_bounds = array<i64: 64, 32>}, {pipeline_mode = #tpu.pipeline_mode<synchronous>, transform_indices = @transform_4, window_bounds = array<i64: 32, 32>}, {pipeline_mode = #tpu.pipeline_mode<synchronous>, transform_indices = @transform_5, window_bounds = array<i64: 32, 8>}, {pipeline_mode = #tpu.pipeline_mode<synchronous>, transform_indices = @transform_6, window_bounds = array<i64: 8, 32>}, {transform_indices = @transform_7, window_bounds = array<i64: 16, 32>}]} {
    %c0 = arith.constant 0 : index
    %c0_0 = arith.constant 0 : index
    %0 = vector.load %arg1[%c0, %c0_0] : memref<16x32xf32, #tpu.memory_space<vmem>>, vector<16x32xf32>
    %c0_1 = arith.constant 0 : index
    %c0_2 = arith.constant 0 : index
    %1 = vector.load %arg2[%c0_1, %c0_2] : memref<16x32xf32, #tpu.memory_space<vmem>>, vector<16x32xf32>
    %2 = arith.truncf %0 : vector<16x32xf32> to vector<16x32xbf16>
    %3 = arith.truncf %1 : vector<16x32xf32> to vector<16x32xbf16>
    %c0_3 = arith.constant 0 : index
    %c0_4 = arith.constant 0 : index
    %4 = vector.load %arg3[%c0_3, %c0_4] : memref<32x32xbf16, #tpu.memory_space<vmem>>, vector<32x32xbf16>
    %cst = arith.constant dense<0.000000e+00> : vector<32x16xf32>
    %5 = tpu.matmul %4, %2, %cst {dimension_numbers = #tpu.dot_dimension_numbers<[1], [1], [0], [0], [0, 0, 1, 0], [], []>} : vector<32x32xbf16>, vector<16x32xbf16>, vector<32x16xf32> -> vector<32x16xf32>
    %c0_5 = arith.constant 0 : index
    %c0_6 = arith.constant 0 : index
    %6 = vector.load %arg6[%c0_5, %c0_6] : memref<32x8xf32, #tpu.memory_space<vmem>>, vector<32x1xf32>
    %7 = vector.broadcast %6 : vector<32x1xf32> to vector<32x16xf32>
    %8 = arith.addf %5, %7 : vector<32x16xf32>
    %c0_7 = arith.constant 0 : index
    %c0_8 = arith.constant 0 : index
    %9 = vector.load %arg4[%c0_7, %c0_8] : memref<64x32xbf16, #tpu.memory_space<vmem>>, vector<64x32xbf16>
    %cst_9 = arith.constant dense<0.000000e+00> : vector<64x16xf32>
    %10 = tpu.matmul %9, %3, %cst_9 {dimension_numbers = #tpu.dot_dimension_numbers<[1], [1], [0], [0], [0, 0, 1, 0], [], []>} : vector<64x32xbf16>, vector<16x32xbf16>, vector<64x16xf32> -> vector<64x16xf32>
    %11 = vector.extract_strided_slice %10 {offsets = [0, 0], sizes = [32, 16], strides = [1, 1]} : vector<64x16xf32> to vector<32x16xf32>
    %c0_10 = arith.constant 0 : index
    %c1 = arith.constant 1 : index
    %12 = vector.load %arg6[%c0_10, %c1] : memref<32x8xf32, #tpu.memory_space<vmem>>, vector<32x1xf32>
    %13 = vector.broadcast %12 : vector<32x1xf32> to vector<32x16xf32>
    %14 = arith.addf %11, %13 : vector<32x16xf32>
    %15 = vector.extract_strided_slice %10 {offsets = [32, 0], sizes = [32, 16], strides = [1, 1]} : vector<64x16xf32> to vector<32x16xf32>
    %c0_11 = arith.constant 0 : index
    %c2 = arith.constant 2 : index
    %16 = vector.load %arg6[%c0_11, %c2] : memref<32x8xf32, #tpu.memory_space<vmem>>, vector<32x1xf32>
    %17 = vector.broadcast %16 : vector<32x1xf32> to vector<32x16xf32>
    %18 = arith.addf %15, %17 : vector<32x16xf32>
    %19 = vector.shape_cast %8 : vector<32x16xf32> to vector<8x4x16xf32>
    %20 = vector.shape_cast %14 : vector<32x16xf32> to vector<8x4x16xf32>
    %21 = vector.shape_cast %18 : vector<32x16xf32> to vector<8x4x16xf32>
    %22 = vector.extract_strided_slice %19 {offsets = [0, 0, 0], sizes = [8, 1, 16], strides = [1, 1, 1]} : vector<8x4x16xf32> to vector<8x1x16xf32>
    %23 = vector.shape_cast %22 : vector<8x1x16xf32> to vector<8x16xf32>
    %24 = vector.shape_cast %23 : vector<8x16xf32> to vector<8x1x16xf32>
    %25 = vector.extract_strided_slice %20 {offsets = [0, 0, 0], sizes = [8, 1, 16], strides = [1, 1, 1]} : vector<8x4x16xf32> to vector<8x1x16xf32>
    %26 = vector.shape_cast %25 : vector<8x1x16xf32> to vector<8x16xf32>
    %27 = vector.shape_cast %26 : vector<8x16xf32> to vector<1x8x16xf32>
    %28 = vector.broadcast %24 : vector<8x1x16xf32> to vector<8x8x16xf32>
    %29 = vector.broadcast %27 : vector<1x8x16xf32> to vector<8x8x16xf32>
    %30 = arith.mulf %28, %29 : vector<8x8x16xf32>
    %31 = vector.extract_strided_slice %19 {offsets = [0, 1, 0], sizes = [8, 1, 16], strides = [1, 1, 1]} : vector<8x4x16xf32> to vector<8x1x16xf32>
    %32 = vector.shape_cast %31 : vector<8x1x16xf32> to vector<8x16xf32>
    %33 = vector.shape_cast %32 : vector<8x16xf32> to vector<8x1x16xf32>
    %34 = vector.extract_strided_slice %20 {offsets = [0, 1, 0], sizes = [8, 1, 16], strides = [1, 1, 1]} : vector<8x4x16xf32> to vector<8x1x16xf32>
    %35 = vector.shape_cast %34 : vector<8x1x16xf32> to vector<8x16xf32>
    %36 = vector.shape_cast %35 : vector<8x16xf32> to vector<1x8x16xf32>
    %37 = vector.broadcast %33 : vector<8x1x16xf32> to vector<8x8x16xf32>
    %38 = vector.broadcast %36 : vector<1x8x16xf32> to vector<8x8x16xf32>
    %39 = arith.mulf %37, %38 : vector<8x8x16xf32>
    %40 = arith.addf %30, %39 : vector<8x8x16xf32>
    %41 = vector.extract_strided_slice %19 {offsets = [0, 2, 0], sizes = [8, 1, 16], strides = [1, 1, 1]} : vector<8x4x16xf32> to vector<8x1x16xf32>
    %42 = vector.shape_cast %41 : vector<8x1x16xf32> to vector<8x16xf32>
    %43 = vector.shape_cast %42 : vector<8x16xf32> to vector<8x1x16xf32>
    %44 = vector.extract_strided_slice %20 {offsets = [0, 2, 0], sizes = [8, 1, 16], strides = [1, 1, 1]} : vector<8x4x16xf32> to vector<8x1x16xf32>
    %45 = vector.shape_cast %44 : vector<8x1x16xf32> to vector<8x16xf32>
    %46 = vector.shape_cast %45 : vector<8x16xf32> to vector<1x8x16xf32>
    %47 = vector.broadcast %43 : vector<8x1x16xf32> to vector<8x8x16xf32>
    %48 = vector.broadcast %46 : vector<1x8x16xf32> to vector<8x8x16xf32>
    %49 = arith.mulf %47, %48 : vector<8x8x16xf32>
    %50 = arith.addf %40, %49 : vector<8x8x16xf32>
    %51 = vector.extract_strided_slice %19 {offsets = [0, 3, 0], sizes = [8, 1, 16], strides = [1, 1, 1]} : vector<8x4x16xf32> to vector<8x1x16xf32>
    %52 = vector.shape_cast %51 : vector<8x1x16xf32> to vector<8x16xf32>
    %53 = vector.shape_cast %52 : vector<8x16xf32> to vector<8x1x16xf32>
    %54 = vector.extract_strided_slice %20 {offsets = [0, 3, 0], sizes = [8, 1, 16], strides = [1, 1, 1]} : vector<8x4x16xf32> to vector<8x1x16xf32>
    %55 = vector.shape_cast %54 : vector<8x1x16xf32> to vector<8x16xf32>
    %56 = vector.shape_cast %55 : vector<8x16xf32> to vector<1x8x16xf32>
    %57 = vector.broadcast %53 : vector<8x1x16xf32> to vector<8x8x16xf32>
    %58 = vector.broadcast %56 : vector<1x8x16xf32> to vector<8x8x16xf32>
    %59 = arith.mulf %57, %58 : vector<8x8x16xf32>
    %60 = arith.addf %50, %59 : vector<8x8x16xf32>
    %cst_12 = arith.constant dense<0xFF800000> : vector<8x16xf32>
    %61 = vector.multi_reduction <maximumf>, %60, %cst_12 [1] : vector<8x8x16xf32> to vector<8x16xf32>
    %62 = vector.shape_cast %61 : vector<8x16xf32> to vector<8x1x16xf32>
    %63 = vector.broadcast %62 : vector<8x1x16xf32> to vector<8x8x16xf32>
    %64 = arith.subf %60, %63 : vector<8x8x16xf32>
    %65 = math.exp %64 : vector<8x8x16xf32>
    %cst_13 = arith.constant dense<0.000000e+00> : vector<8x16xf32>
    %66 = vector.multi_reduction <add>, %65, %cst_13 [1] : vector<8x8x16xf32> to vector<8x16xf32>
    %67 = vector.shape_cast %66 : vector<8x16xf32> to vector<8x1x16xf32>
    %68 = tpu.reciprocal %67 {approx = true} : vector<8x1x16xf32> -> vector<8x1x16xf32>
    %69 = vector.broadcast %68 : vector<8x1x16xf32> to vector<8x8x16xf32>
    %70 = arith.mulf %65, %69 : vector<8x8x16xf32>
    %71 = vector.extract_strided_slice %70 {offsets = [0, 0, 0], sizes = [8, 1, 16], strides = [1, 1, 1]} : vector<8x8x16xf32> to vector<8x1x16xf32>
    %72 = vector.shape_cast %71 : vector<8x1x16xf32> to vector<8x16xf32>
    %73 = vector.shape_cast %72 : vector<8x16xf32> to vector<8x1x16xf32>
    %74 = vector.extract_strided_slice %21 {offsets = [0, 0, 0], sizes = [1, 4, 16], strides = [1, 1, 1]} : vector<8x4x16xf32> to vector<1x4x16xf32>
    %75 = vector.shape_cast %74 : vector<1x4x16xf32> to vector<4x16xf32>
    %76 = vector.shape_cast %75 : vector<4x16xf32> to vector<1x4x16xf32>
    %77 = vector.broadcast %73 : vector<8x1x16xf32> to vector<8x4x16xf32>
    %78 = vector.broadcast %76 : vector<1x4x16xf32> to vector<8x4x16xf32>
    %79 = arith.mulf %77, %78 : vector<8x4x16xf32>
    %80 = vector.extract_strided_slice %70 {offsets = [0, 1, 0], sizes = [8, 1, 16], strides = [1, 1, 1]} : vector<8x8x16xf32> to vector<8x1x16xf32>
    %81 = vector.shape_cast %80 : vector<8x1x16xf32> to vector<8x16xf32>
    %82 = vector.shape_cast %81 : vector<8x16xf32> to vector<8x1x16xf32>
    %83 = vector.extract_strided_slice %21 {offsets = [1, 0, 0], sizes = [1, 4, 16], strides = [1, 1, 1]} : vector<8x4x16xf32> to vector<1x4x16xf32>
    %84 = vector.shape_cast %83 : vector<1x4x16xf32> to vector<4x16xf32>
    %85 = vector.shape_cast %84 : vector<4x16xf32> to vector<1x4x16xf32>
    %86 = vector.broadcast %82 : vector<8x1x16xf32> to vector<8x4x16xf32>
    %87 = vector.broadcast %85 : vector<1x4x16xf32> to vector<8x4x16xf32>
    %88 = arith.mulf %86, %87 : vector<8x4x16xf32>
    %89 = arith.addf %79, %88 : vector<8x4x16xf32>
    %90 = vector.extract_strided_slice %70 {offsets = [0, 2, 0], sizes = [8, 1, 16], strides = [1, 1, 1]} : vector<8x8x16xf32> to vector<8x1x16xf32>
    %91 = vector.shape_cast %90 : vector<8x1x16xf32> to vector<8x16xf32>
    %92 = vector.shape_cast %91 : vector<8x16xf32> to vector<8x1x16xf32>
    %93 = vector.extract_strided_slice %21 {offsets = [2, 0, 0], sizes = [1, 4, 16], strides = [1, 1, 1]} : vector<8x4x16xf32> to vector<1x4x16xf32>
    %94 = vector.shape_cast %93 : vector<1x4x16xf32> to vector<4x16xf32>
    %95 = vector.shape_cast %94 : vector<4x16xf32> to vector<1x4x16xf32>
    %96 = vector.broadcast %92 : vector<8x1x16xf32> to vector<8x4x16xf32>
    %97 = vector.broadcast %95 : vector<1x4x16xf32> to vector<8x4x16xf32>
    %98 = arith.mulf %96, %97 : vector<8x4x16xf32>
    %99 = arith.addf %89, %98 : vector<8x4x16xf32>
    %100 = vector.extract_strided_slice %70 {offsets = [0, 3, 0], sizes = [8, 1, 16], strides = [1, 1, 1]} : vector<8x8x16xf32> to vector<8x1x16xf32>
    %101 = vector.shape_cast %100 : vector<8x1x16xf32> to vector<8x16xf32>
    %102 = vector.shape_cast %101 : vector<8x16xf32> to vector<8x1x16xf32>
    %103 = vector.extract_strided_slice %21 {offsets = [3, 0, 0], sizes = [1, 4, 16], strides = [1, 1, 1]} : vector<8x4x16xf32> to vector<1x4x16xf32>
    %104 = vector.shape_cast %103 : vector<1x4x16xf32> to vector<4x16xf32>
    %105 = vector.shape_cast %104 : vector<4x16xf32> to vector<1x4x16xf32>
    %106 = vector.broadcast %102 : vector<8x1x16xf32> to vector<8x4x16xf32>
    %107 = vector.broadcast %105 : vector<1x4x16xf32> to vector<8x4x16xf32>
    %108 = arith.mulf %106, %107 : vector<8x4x16xf32>
    %109 = arith.addf %99, %108 : vector<8x4x16xf32>
    %110 = vector.extract_strided_slice %70 {offsets = [0, 4, 0], sizes = [8, 1, 16], strides = [1, 1, 1]} : vector<8x8x16xf32> to vector<8x1x16xf32>
    %111 = vector.shape_cast %110 : vector<8x1x16xf32> to vector<8x16xf32>
    %112 = vector.shape_cast %111 : vector<8x16xf32> to vector<8x1x16xf32>
    %113 = vector.extract_strided_slice %21 {offsets = [4, 0, 0], sizes = [1, 4, 16], strides = [1, 1, 1]} : vector<8x4x16xf32> to vector<1x4x16xf32>
    %114 = vector.shape_cast %113 : vector<1x4x16xf32> to vector<4x16xf32>
    %115 = vector.shape_cast %114 : vector<4x16xf32> to vector<1x4x16xf32>
    %116 = vector.broadcast %112 : vector<8x1x16xf32> to vector<8x4x16xf32>
    %117 = vector.broadcast %115 : vector<1x4x16xf32> to vector<8x4x16xf32>
    %118 = arith.mulf %116, %117 : vector<8x4x16xf32>
    %119 = arith.addf %109, %118 : vector<8x4x16xf32>
    %120 = vector.extract_strided_slice %70 {offsets = [0, 5, 0], sizes = [8, 1, 16], strides = [1, 1, 1]} : vector<8x8x16xf32> to vector<8x1x16xf32>
    %121 = vector.shape_cast %120 : vector<8x1x16xf32> to vector<8x16xf32>
    %122 = vector.shape_cast %121 : vector<8x16xf32> to vector<8x1x16xf32>
    %123 = vector.extract_strided_slice %21 {offsets = [5, 0, 0], sizes = [1, 4, 16], strides = [1, 1, 1]} : vector<8x4x16xf32> to vector<1x4x16xf32>
    %124 = vector.shape_cast %123 : vector<1x4x16xf32> to vector<4x16xf32>
    %125 = vector.shape_cast %124 : vector<4x16xf32> to vector<1x4x16xf32>
    %126 = vector.broadcast %122 : vector<8x1x16xf32> to vector<8x4x16xf32>
    %127 = vector.broadcast %125 : vector<1x4x16xf32> to vector<8x4x16xf32>
    %128 = arith.mulf %126, %127 : vector<8x4x16xf32>
    %129 = arith.addf %119, %128 : vector<8x4x16xf32>
    %130 = vector.extract_strided_slice %70 {offsets = [0, 6, 0], sizes = [8, 1, 16], strides = [1, 1, 1]} : vector<8x8x16xf32> to vector<8x1x16xf32>
    %131 = vector.shape_cast %130 : vector<8x1x16xf32> to vector<8x16xf32>
    %132 = vector.shape_cast %131 : vector<8x16xf32> to vector<8x1x16xf32>
    %133 = vector.extract_strided_slice %21 {offsets = [6, 0, 0], sizes = [1, 4, 16], strides = [1, 1, 1]} : vector<8x4x16xf32> to vector<1x4x16xf32>
    %134 = vector.shape_cast %133 : vector<1x4x16xf32> to vector<4x16xf32>
    %135 = vector.shape_cast %134 : vector<4x16xf32> to vector<1x4x16xf32>
    %136 = vector.broadcast %132 : vector<8x1x16xf32> to vector<8x4x16xf32>
    %137 = vector.broadcast %135 : vector<1x4x16xf32> to vector<8x4x16xf32>
    %138 = arith.mulf %136, %137 : vector<8x4x16xf32>
    %139 = arith.addf %129, %138 : vector<8x4x16xf32>
    %140 = vector.extract_strided_slice %70 {offsets = [0, 7, 0], sizes = [8, 1, 16], strides = [1, 1, 1]} : vector<8x8x16xf32> to vector<8x1x16xf32>
    %141 = vector.shape_cast %140 : vector<8x1x16xf32> to vector<8x16xf32>
    %142 = vector.shape_cast %141 : vector<8x16xf32> to vector<8x1x16xf32>
    %143 = vector.extract_strided_slice %21 {offsets = [7, 0, 0], sizes = [1, 4, 16], strides = [1, 1, 1]} : vector<8x4x16xf32> to vector<1x4x16xf32>
    %144 = vector.shape_cast %143 : vector<1x4x16xf32> to vector<4x16xf32>
    %145 = vector.shape_cast %144 : vector<4x16xf32> to vector<1x4x16xf32>
    %146 = vector.broadcast %142 : vector<8x1x16xf32> to vector<8x4x16xf32>
    %147 = vector.broadcast %145 : vector<1x4x16xf32> to vector<8x4x16xf32>
    %148 = arith.mulf %146, %147 : vector<8x4x16xf32>
    %149 = arith.addf %139, %148 : vector<8x4x16xf32>
    %150 = vector.shape_cast %149 : vector<8x4x16xf32> to vector<32x16xf32>
    %151 = arith.truncf %150 : vector<32x16xf32> to vector<32x16xbf16>
    %c0_14 = arith.constant 0 : index
    %c0_15 = arith.constant 0 : index
    %152 = vector.load %arg5[%c0_14, %c0_15] : memref<32x32xbf16, #tpu.memory_space<vmem>>, vector<32x32xbf16>
    %cst_16 = arith.constant dense<0.000000e+00> : vector<16x32xf32>
    %153 = tpu.matmul %151, %152, %cst_16 {dimension_numbers = #tpu.dot_dimension_numbers<[0], [0], [1], [1], [0, 1, 1, 1], [], []>} : vector<32x16xbf16>, vector<32x32xbf16>, vector<16x32xf32> -> vector<16x32xf32>
    %c0_17 = arith.constant 0 : index
    %c0_18 = arith.constant 0 : index
    %154 = vector.load %arg7[%c0_17, %c0_18] : memref<8x32xf32, #tpu.memory_space<vmem>>, vector<1x32xf32>
    %155 = vector.broadcast %154 : vector<1x32xf32> to vector<16x32xf32>
    %156 = arith.addf %153, %155 : vector<16x32xf32>
    %157 = arith.addf %0, %156 : vector<16x32xf32>
    %c1_19 = arith.constant 1 : index
    %c0_20 = arith.constant 0 : index
    %158 = vector.load %arg7[%c1_19, %c0_20] : memref<8x32xf32, #tpu.memory_space<vmem>>, vector<1x32xf32>
    %c2_21 = arith.constant 2 : index
    %c0_22 = arith.constant 0 : index
    %159 = vector.load %arg7[%c2_21, %c0_22] : memref<8x32xf32, #tpu.memory_space<vmem>>, vector<1x32xf32>
    %cst_23 = arith.constant dense<0.000000e+00> : vector<16xf32>
    %160 = vector.multi_reduction <add>, %157, %cst_23 [1] : vector<16x32xf32> to vector<16xf32>
    %161 = vector.shape_cast %160 : vector<16xf32> to vector<16x1xf32>
    %cst_24 = arith.constant 3.200000e+01 : f32
    %162 = vector.broadcast %cst_24 : f32 to vector<16x1xf32>
    %163 = arith.divf %161, %162 : vector<16x1xf32>
    %164 = vector.broadcast %163 : vector<16x1xf32> to vector<16x32xf32>
    %165 = arith.subf %157, %164 : vector<16x32xf32>
    %166 = arith.mulf %165, %165 : vector<16x32xf32>
    %cst_25 = arith.constant dense<0.000000e+00> : vector<16xf32>
    %167 = vector.multi_reduction <add>, %166, %cst_25 [1] : vector<16x32xf32> to vector<16xf32>
    %168 = vector.shape_cast %167 : vector<16xf32> to vector<16x1xf32>
    %cst_26 = arith.constant 3.200000e+01 : f32
    %169 = vector.broadcast %cst_26 : f32 to vector<16x1xf32>
    %170 = arith.divf %168, %169 : vector<16x1xf32>
    %171 = vector.broadcast %163 : vector<16x1xf32> to vector<16x32xf32>
    %172 = arith.subf %157, %171 : vector<16x32xf32>
    %cst_27 = arith.constant 9.99999974E-6 : f32
    %173 = vector.broadcast %cst_27 : f32 to vector<16x1xf32>
    %174 = arith.addf %170, %173 : vector<16x1xf32>
    %175 = math.rsqrt %174 : vector<16x1xf32>
    %176 = vector.broadcast %175 : vector<16x1xf32> to vector<16x32xf32>
    %177 = arith.mulf %172, %176 : vector<16x32xf32>
    %178 = vector.broadcast %158 : vector<1x32xf32> to vector<16x32xf32>
    %179 = arith.mulf %177, %178 : vector<16x32xf32>
    %180 = vector.broadcast %159 : vector<1x32xf32> to vector<16x32xf32>
    %181 = arith.addf %179, %180 : vector<16x32xf32>
    %182 = arith.addf %181, %181 : vector<16x32xf32>
    %c3 = arith.constant 3 : index
    %c0_28 = arith.constant 0 : index
    %183 = vector.load %arg7[%c3, %c0_28] : memref<8x32xf32, #tpu.memory_space<vmem>>, vector<1x32xf32>
    %c4 = arith.constant 4 : index
    %c0_29 = arith.constant 0 : index
    %184 = vector.load %arg7[%c4, %c0_29] : memref<8x32xf32, #tpu.memory_space<vmem>>, vector<1x32xf32>
    %cst_30 = arith.constant dense<0.000000e+00> : vector<16xf32>
    %185 = vector.multi_reduction <add>, %182, %cst_30 [1] : vector<16x32xf32> to vector<16xf32>
    %186 = vector.shape_cast %185 : vector<16xf32> to vector<16x1xf32>
    %cst_31 = arith.constant 3.200000e+01 : f32
    %187 = vector.broadcast %cst_31 : f32 to vector<16x1xf32>
    %188 = arith.divf %186, %187 : vector<16x1xf32>
    %189 = vector.broadcast %188 : vector<16x1xf32> to vector<16x32xf32>
    %190 = arith.subf %182, %189 : vector<16x32xf32>
    %191 = arith.mulf %190, %190 : vector<16x32xf32>
    %cst_32 = arith.constant dense<0.000000e+00> : vector<16xf32>
    %192 = vector.multi_reduction <add>, %191, %cst_32 [1] : vector<16x32xf32> to vector<16xf32>
    %193 = vector.shape_cast %192 : vector<16xf32> to vector<16x1xf32>
    %cst_33 = arith.constant 3.200000e+01 : f32
    %194 = vector.broadcast %cst_33 : f32 to vector<16x1xf32>
    %195 = arith.divf %193, %194 : vector<16x1xf32>
    %196 = vector.broadcast %188 : vector<16x1xf32> to vector<16x32xf32>
    %197 = arith.subf %182, %196 : vector<16x32xf32>
    %cst_34 = arith.constant 9.99999974E-6 : f32
    %198 = vector.broadcast %cst_34 : f32 to vector<16x1xf32>
    %199 = arith.addf %195, %198 : vector<16x1xf32>
    %200 = math.rsqrt %199 : vector<16x1xf32>
    %201 = vector.broadcast %200 : vector<16x1xf32> to vector<16x32xf32>
    %202 = arith.mulf %197, %201 : vector<16x32xf32>
    %203 = vector.broadcast %183 : vector<1x32xf32> to vector<16x32xf32>
    %204 = arith.mulf %202, %203 : vector<16x32xf32>
    %205 = vector.broadcast %184 : vector<1x32xf32> to vector<16x32xf32>
    %206 = arith.addf %204, %205 : vector<16x32xf32>
    %c0_35 = arith.constant 0 : index
    %c0_36 = arith.constant 0 : index
    %207 = vector.load %arg8[%c0_35, %c0_36] : memref<16x32xf32, #tpu.memory_space<vmem>>, vector<16x32xf32>
    tpu.vector_store %arg8[%c0_35, %c0_36], %206 {strides = array<i32>} : memref<16x32xf32, #tpu.memory_space<vmem>>, vector<16x32xf32>,
    return
  }
  func.func @transform_0(%arg0: i32) -> (i32, i32) {
    %c0_i32 = arith.constant 0 : i32
    %c0_i32_0 = arith.constant 0 : i32
    return %arg0, %c0_i32 : i32, i32
  }
  func.func @transform_1(%arg0: i32) -> (i32, i32) {
    %c0_i32 = arith.constant 0 : i32
    %c0_i32_0 = arith.constant 0 : i32
    return %arg0, %c0_i32 : i32, i32
  }
  func.func @transform_2(%arg0: i32) -> (i32, i32) {
    %c0_i32 = arith.constant 0 : i32
    %c0_i32_0 = arith.constant 0 : i32
    %c0_i32_1 = arith.constant 0 : i32
    return %c0_i32, %c0_i32_0 : i32, i32
  }
  func.func @transform_3(%arg0: i32) -> (i32, i32) {
    %c0_i32 = arith.constant 0 : i32
    %c0_i32_0 = arith.constant 0 : i32
    %c0_i32_1 = arith.constant 0 : i32
    return %c0_i32, %c0_i32_0 : i32, i32
  }
  func.func @transform_4(%arg0: i32) -> (i32, i32) {
    %c0_i32 = arith.constant 0 : i32
    %c0_i32_0 = arith.constant 0 : i32
    %c0_i32_1 = arith.constant 0 : i32
    return %c0_i32, %c0_i32_0 : i32, i32
  }
  func.func @transform_5(%arg0: i32) -> (i32, i32) {
    %c0_i32 = arith.constant 0 : i32
    %c0_i32_0 = arith.constant 0 : i32
    %c0_i32_1 = arith.constant 0 : i32
    return %c0_i32, %c0_i32_0 : i32, i32
  }
  func.func @transform_6(%arg0: i32) -> (i32, i32) {
    %c0_i32 = arith.constant 0 : i32
    %c0_i32_0 = arith.constant 0 : i32
    %c0_i32_1 = arith.constant 0 : i32
    return %c0_i32, %c0_i32_0 : i32, i32
  }
  func.func @transform_7(%arg0: i32) -> (i32, i32) {
    %c0_i32 = arith.constant 0 : i32
    %c0_i32_0 = arith.constant 0 : i32
    return %arg0, %c0_i32 : i32, i32
  }
}

</mosaic_0001>

<llo_original>
// kernel: tpu_custom_call.1
$region0: #{tpu_custom_call.1}
  #allocation0 [shape = 'u32[]', space=smem, size = 0x4, offset = 0x4, fixed_abs, tag = 'smem constant byte address 0x4 - core index']
  #allocation1 [shape = 'u32[144,128]{1,0:T(1,128)}', space=vmem, size = 0x12000, scoped, tag = 'internal scratch']
  %s0 = inlined_call_operand.vmem [shape: f32[16,32], index: 0, kind: input, shape index: {}]
  %s1 = inlined_call_operand.vmem [shape: f32[16,32], index: 1, kind: input, shape index: {}]
  %s2 = inlined_call_operand.vmem [shape: bf16[32,32], index: 2, kind: input, shape index: {}]
  %s3 = inlined_call_operand.vmem [shape: bf16[64,32], index: 3, kind: input, shape index: {}]
  %s4 = inlined_call_operand.vmem [shape: bf16[32,32], index: 4, kind: input, shape index: {}]
  %s5 = inlined_call_operand.vmem [shape: f32[32,8], index: 5, kind: input, shape index: {}]
  %s6 = inlined_call_operand.vmem [shape: f32[8,32], index: 6, kind: input, shape index: {}]
  %s7 = inlined_call_operand.hbm [shape: f32[16,32], index: 7, kind: output, shape index: {}]
  %s8 = sld [smem:[#allocation0]]
  $region38: #{tpu_custom_call.1} parent=0
    _
  %s10 = ssub.s32 1, %s8
  %s11 = scalar_select 0, %s10, %s8
  $region1: #{tpu_custom_call.1} parent=0
    #allocation2 [shape = 'u8[8192]{0}', space=vmem, size = 0x2000, scoped, tag = 'output window, operand 0, single buffered']
    #allocation3 [shape = 's32[1]{0}', space=sflag, size = 0x4, scoped, tag = 'scoped memory for tpu_custom_call.1']
    %12 = vsyncpa [#allocation3], 0
    // Predicated region
    $region2: #{tpu_custom_call.1} parent=1 // pred_check
      _
    $region3: #{tpu_custom_call.1} parent=1 // pred_check_branch
      %14 = sbr.rel (0) target = $region5
    $region4: #{tpu_custom_call.1} parent=1 // pred_region
      _
    $region5: #{tpu_custom_call.1} parent=1 // pred_fallthru
      _
    // Predicated region
    $region6: #{tpu_custom_call.1} parent=1 // pred_check
      _
    $region7: #{tpu_custom_call.1} parent=1 // pred_check_branch
      %16 = sbr.rel (0) target = $region9
    $region8: #{tpu_custom_call.1} parent=1 // pred_region
      _
    $region9: #{tpu_custom_call.1} parent=1 // pred_fallthru
      _
    // Predicated region
    $region10: #{tpu_custom_call.1} parent=1 // pred_check
      _
    $region11: #{tpu_custom_call.1} parent=1 // pred_check_branch
      %18 = sbr.rel (0) target = $region13
    $region12: #{tpu_custom_call.1} parent=1 // pred_region
      _
    $region13: #{tpu_custom_call.1} parent=1 // pred_fallthru
      _
    // Predicated region
    $region14: #{tpu_custom_call.1} parent=1 // pred_check
      _
    $region15: #{tpu_custom_call.1} parent=1 // pred_check_branch
      %20 = sbr.rel (0) target = $region17
    $region16: #{tpu_custom_call.1} parent=1 // pred_region
      _
    $region17: #{tpu_custom_call.1} parent=1 // pred_fallthru
      _
    // Predicated region
    $region18: #{tpu_custom_call.1} parent=1 // pred_check
      _
    $region19: #{tpu_custom_call.1} parent=1 // pred_check_branch
      %22 = sbr.rel (0) target = $region21
    $region20: #{tpu_custom_call.1} parent=1 // pred_region
      _
    $region21: #{tpu_custom_call.1} parent=1 // pred_fallthru
      _
    // Predicated region
    $region22: #{tpu_custom_call.1} parent=1 // pred_check
      _
    $region23: #{tpu_custom_call.1} parent=1 // pred_check_branch
      %24 = sbr.rel (0) target = $region25
    $region24: #{tpu_custom_call.1} parent=1 // pred_region
      _
    $region25: #{tpu_custom_call.1} parent=1 // pred_fallthru
      _
    // Predicated region
    $region26: #{tpu_custom_call.1} parent=1 // pred_check
      _
    $region27: #{tpu_custom_call.1} parent=1 // pred_check_branch
      %26 = sbr.rel (0) target = $region29
    $region28: #{tpu_custom_call.1} parent=1 // pred_region
      _
    $region29: #{tpu_custom_call.1} parent=1 // pred_fallthru
      _
    %v28 = vld [vmem:[%s0] sm:$0xff]
    %v29 = vld [vmem:[%s0 + $0x8] sm:$0xff]
    %v30 = vld [vmem:[%s1] sm:$0xff]
    %v31 = vld [vmem:[%s1 + $0x8] sm:$0xff]
    %v32 = vpack.c.bf16 %v29, %v28
    %v33 = vpack.c.bf16 %v31, %v30
    %v34 = vld [vmem:[%s2] sm:$0xf]
    %v35 = vld [vmem:[%s2 + $0x4] sm:$0xf]
    %v36 = vld [vmem:[%s2 + $0x8] sm:$0xf]
    %v37 = vld [vmem:[%s2 + $0xc] sm:$0xf]
    %v38 = vld [vmem:[%s5] sm:$0xff]
    %v39 = vld [vmem:[%s5 + $0x8] sm:$0xff]
    %v40 = vld [vmem:[%s5 + $0x10] sm:$0xff]
    %v41 = vld [vmem:[%s5 + $0x18] sm:$0xff]
    %43 = vset.pattern.permute.xlu0 0
    %44 = vperm.xlu0 %43, %v38
    %v45 = vpop.permute.xlu0 %44
    %48 = vset.pattern.permute.xlu0 0
    %49 = vperm.xlu0 %48, %v39
    %v50 = vpop.permute.xlu0 %49
    %53 = vset.pattern.permute.xlu0 0
    %54 = vperm.xlu0 %53, %v40
    %v55 = vpop.permute.xlu0 %54
    %58 = vset.pattern.permute.xlu0 0
    %59 = vperm.xlu0 %58, %v41
    %v60 = vpop.permute.xlu0 %59
    %v66 = vunpack.c.l.b16 %v34
    %v67 = vunpack.c.l.b16 %v35
    %v68 = vunpack.c.l.b16 %v36
    %v69 = vunpack.c.l.b16 %v37
    %v70 = vpack.c.b16 %v67, %v66
    %v71 = vpack.c.b16 %v69, %v68
    %vm72 = vcmask 261120
    %v74 = vsel %vm72, %v70, 0
    %v77 = vsel %vm72, %v71, 0
    %v80 = vsel %vm72, %v32, 0
    %82 = vmatprep.subr.bf16.mxu0 0
    %83 = vmatpush1.bf16.xpose.msra.mxu0 %v80
    %84 = vmatprep.subr.bf16.mxu0 0
    %85 = vmatpush1.bf16.xpose.msra.mxu0 0
    %86 = vmatprep.subr.bf16.mxu0 0
    %87 = vmatpush1.bf16.xpose.msra.mxu0 0
    %88 = vmatprep.subr.bf16.mxu0 0
    %89 = vmatpush1.bf16.xpose.msra.mxu0 0
    %90 = vmatprep.subr.bf16.mxu0 0
    %91 = vmatpush1.bf16.xpose.msra.mxu0 0
    %92 = vmatprep.subr.bf16.mxu0 0
    %93 = vmatpush1.bf16.xpose.msra.mxu0 0
    %94 = vmatprep.subr.bf16.mxu0 0
    %95 = vmatpush1.bf16.xpose.msra.mxu0 0
    %96 = vmatprep.subr.bf16.mxu0 0
    %97 = vmatpush1.bf16.xpose.msra.mxu0 0
    %98 = vmatprep.subr.bf16.mxu0 0
    %99 = vmatpush1.bf16.xpose.msra.mxu0 0
    %100 = vmatprep.subr.bf16.mxu0 0
    %101 = vmatpush1.bf16.xpose.msra.mxu0 0
    %102 = vmatprep.subr.bf16.mxu0 0
    %103 = vmatpush1.bf16.xpose.msra.mxu0 0
    %104 = vmatprep.subr.bf16.mxu0 0
    %105 = vmatpush1.bf16.xpose.msra.mxu0 0
    %106 = vmatprep.subr.bf16.mxu0 0
    %107 = vmatpush1.bf16.xpose.msra.mxu0 0
    %108 = vmatprep.subr.bf16.mxu0 0
    %109 = vmatpush1.bf16.xpose.msra.mxu0 0
    %110 = vmatprep.subr.bf16.mxu0 0
    %111 = vmatpush1.bf16.xpose.msra.mxu0 0
    %112 = vmatprep.subr.bf16.mxu0 0
    %113 = vmatpush1.bf16.xpose.msra.mxu0 0
    %114 = vmatprep.mubr.bf16.mxu0 0
    %115 = vmatmul.mubr.bf16.gmra.mrb[0].mxu0 %v74
    %v116 = vpop.f32.mrb[0].mxu0
    %v117 = vadd.f32 %v45, %v116
    %v118 = vpop.f32.mrb[0].mxu0
    %v119 = vpop.f32.mrb[0].mxu0
    %v120 = vadd.f32 %v50, %v119
    %v121 = vpop.f32.mrb[0].mxu0
    %122 = vmatprep.mubr.bf16.mxu0 0
    %123 = vmatmul.mubr.bf16.gmra.mrb[0].mxu0 %v77
    %v124 = vpop.f32.mrb[0].mxu0
    %v125 = vadd.f32 %v55, %v124
    %v126 = vpop.f32.mrb[0].mxu0
    %v127 = vpop.f32.mrb[0].mxu0
    %v128 = vadd.f32 %v60, %v127
    %v129 = vpop.f32.mrb[0].mxu0
    %130 = vdwg.mxu0
    %v131 = vld [vmem:[%s3] sm:$0xf]
    %v132 = vld [vmem:[%s3 + $0x4] sm:$0xf]
    %v133 = vld [vmem:[%s3 + $0x8] sm:$0xf]
    %v134 = vld [vmem:[%s3 + $0xc] sm:$0xf]
    %v135 = vld [vmem:[%s3 + $0x10] sm:$0xf]
    %v136 = vld [vmem:[%s3 + $0x14] sm:$0xf]
    %v137 = vld [vmem:[%s3 + $0x18] sm:$0xf]
    %v138 = vld [vmem:[%s3 + $0x1c] sm:$0xf]
    %v147 = vunpack.c.l.b16 %v131
    %v148 = vunpack.c.l.b16 %v132
    %v149 = vunpack.c.l.b16 %v133
    %v150 = vunpack.c.l.b16 %v134
    %v151 = vunpack.c.l.b16 %v135
    %v152 = vunpack.c.l.b16 %v136
    %v153 = vunpack.c.l.b16 %v137
    %v154 = vunpack.c.l.b16 %v138
    %v155 = vpack.c.b16 %v148, %v147
    %v156 = vpack.c.b16 %v150, %v149
    %v157 = vpack.c.b16 %v152, %v151
    %v158 = vpack.c.b16 %v154, %v153
    %v160 = vsel %vm72, %v155, 0
    %v163 = vsel %vm72, %v156, 0
    %v166 = vsel %vm72, %v157, 0
    %v169 = vsel %vm72, %v158, 0
    %v172 = vsel %vm72, %v33, 0
    %174 = vmatprep.subr.bf16.mxu0 0
    %175 = vmatpush1.bf16.xpose.msra.mxu0 %v172
    %176 = vmatprep.subr.bf16.mxu0 0
    %177 = vmatpush1.bf16.xpose.msra.mxu0 0
    %178 = vmatprep.subr.bf16.mxu0 0
    %179 = vmatpush1.bf16.xpose.msra.mxu0 0
    %180 = vmatprep.subr.bf16.mxu0 0
    %181 = vmatpush1.bf16.xpose.msra.mxu0 0
    %182 = vmatprep.subr.bf16.mxu0 0
    %183 = vmatpush1.bf16.xpose.msra.mxu0 0
    %184 = vmatprep.subr.bf16.mxu0 0
    %185 = vmatpush1.bf16.xpose.msra.mxu0 0
    %186 = vmatprep.subr.bf16.mxu0 0
    %187 = vmatpush1.bf16.xpose.msra.mxu0 0
    %188 = vmatprep.subr.bf16.mxu0 0
    %189 = vmatpush1.bf16.xpose.msra.mxu0 0
    %190 = vmatprep.subr.bf16.mxu0 0
    %191 = vmatpush1.bf16.xpose.msra.mxu0 0
    %192 = vmatprep.subr.bf16.mxu0 0
    %193 = vmatpush1.bf16.xpose.msra.mxu0 0
    %194 = vmatprep.subr.bf16.mxu0 0
    %195 = vmatpush1.bf16.xpose.msra.mxu0 0
    %196 = vmatprep.subr.bf16.mxu0 0
    %197 = vmatpush1.bf16.xpose.msra.mxu0 0
    %198 = vmatprep.subr.bf16.mxu0 0
    %199 = vmatpush1.bf16.xpose.msra.mxu0 0
    %200 = vmatprep.subr.bf16.mxu0 0
    %201 = vmatpush1.bf16.xpose.msra.mxu0 0
    %202 = vmatprep.subr.bf16.mxu0 0
    %203 = vmatpush1.bf16.xpose.msra.mxu0 0
    %204 = vmatprep.subr.bf16.mxu0 0
    %205 = vmatpush1.bf16.xpose.msra.mxu0 0
    %206 = vmatprep.mubr.bf16.mxu0 0
    %207 = vmatmul.mubr.bf16.gmra.mrb[0].mxu0 %v160
    %v208 = vpop.f32.mrb[0].mxu0
    %v209 = vadd.f32 0.0, %v208
    %v210 = vpop.f32.mrb[0].mxu0
    %v211 = vpop.f32.mrb[0].mxu0
    %v212 = vadd.f32 0.0, %v211
    %v213 = vpop.f32.mrb[0].mxu0
    %214 = vmatprep.mubr.bf16.mxu0 0
    %215 = vmatmul.mubr.bf16.gmra.mrb[0].mxu0 %v163
    %v216 = vpop.f32.mrb[0].mxu0
    %v217 = vadd.f32 0.0, %v216
    %v218 = vpop.f32.mrb[0].mxu0
    %v219 = vpop.f32.mrb[0].mxu0
    %v220 = vadd.f32 0.0, %v219
    %v221 = vpop.f32.mrb[0].mxu0
    %222 = vmatprep.mubr.bf16.mxu0 0
    %223 = vmatmul.mubr.bf16.gmra.mrb[0].mxu0 %v166
    %v224 = vpop.f32.mrb[0].mxu0
    %v225 = vadd.f32 0.0, %v224
    %v226 = vpop.f32.mrb[0].mxu0
    %v227 = vpop.f32.mrb[0].mxu0
    %v228 = vadd.f32 0.0, %v227
    %v229 = vpop.f32.mrb[0].mxu0
    %230 = vmatprep.mubr.bf16.mxu0 0
    %231 = vmatmul.mubr.bf16.gmra.mrb[0].mxu0 %v169
    %v232 = vpop.f32.mrb[0].mxu0
    %v233 = vadd.f32 0.0, %v232
    %v234 = vpop.f32.mrb[0].mxu0
    %v235 = vpop.f32.mrb[0].mxu0
    %v236 = vadd.f32 0.0, %v235
    %v237 = vpop.f32.mrb[0].mxu0
    %238 = vdwg.mxu0
    %239 = vset.pattern.permute.xlu0 1
    %240 = vperm.xlu0 %239, %v38
    %v241 = vpop.permute.xlu0 %240
    %243 = vset.pattern.permute.xlu0 1
    %244 = vperm.xlu0 %243, %v39
    %v245 = vpop.permute.xlu0 %244
    %247 = vset.pattern.permute.xlu0 1
    %248 = vperm.xlu0 %247, %v40
    %v249 = vpop.permute.xlu0 %248
    %251 = vset.pattern.permute.xlu0 1
    %252 = vperm.xlu0 %251, %v41
    %v253 = vpop.permute.xlu0 %252
    %v255 = vadd.f32 %v209, %v241
    %v256 = vadd.f32 %v212, %v245
    %v257 = vadd.f32 %v217, %v249
    %v258 = vadd.f32 %v220, %v253
    %259 = vset.pattern.permute.xlu0 2
    %260 = vperm.xlu0 %259, %v38
    %v261 = vpop.permute.xlu0 %260
    %263 = vset.pattern.permute.xlu0 2
    %264 = vperm.xlu0 %263, %v39
    %v265 = vpop.permute.xlu0 %264
    %267 = vset.pattern.permute.xlu0 2
    %268 = vperm.xlu0 %267, %v40
    %v269 = vpop.permute.xlu0 %268
    %271 = vset.pattern.permute.xlu0 2
    %272 = vperm.xlu0 %271, %v41
    %v273 = vpop.permute.xlu0 %272
    %v275 = vadd.f32 %v225, %v261
    %v276 = vadd.f32 %v228, %v265
    %v277 = vadd.f32 %v233, %v269
    %v278 = vadd.f32 %v236, %v273
    %v283 = vcombine.high %v117, %v117
    %v284 = vcombine.high %v120, %v120
    %v285 = vcombine.high %v125, %v125
    %v286 = vcombine.high %v128, %v128
    %v295 = vcombine.high %v255, %v255
    %v296 = vcombine.high %v256, %v256
    %v297 = vcombine.high %v257, %v257
    %v298 = vcombine.high %v258, %v258
    %v303 = vcombine.high %v275, %v275
    %v304 = vcombine.high %v276, %v276
    %v305 = vcombine.high %v277, %v277
    %v306 = vcombine.high %v278, %v278
    %v311 = vlaneseq
    %v312 = vshrl.u32 %v311, 7
    %v313 = vsub.s32 0, %v312
    %v314 = vrot.slane %v117, %v313
    %v315 = vlaneseq
    %v316 = vshrl.u32 %v315, 7
    %v317 = vsub.s32 0, %v316
    %v318 = vrot.slane %v283, %v317
    %v319 = vlaneseq
    %v320 = vshrl.u32 %v319, 7
    %v321 = vsub.s32 0, %v320
    %v322 = vrot.slane %v120, %v321
    %v323 = vlaneseq
    %v324 = vshrl.u32 %v323, 7
    %v325 = vsub.s32 0, %v324
    %v326 = vrot.slane %v284, %v325
    %v327 = vlaneseq
    %v328 = vshrl.u32 %v327, 7
    %v329 = vsub.s32 0, %v328
    %v330 = vrot.slane %v125, %v329
    %v331 = vlaneseq
    %v332 = vshrl.u32 %v331, 7
    %v333 = vsub.s32 0, %v332
    %v334 = vrot.slane %v285, %v333
    %v335 = vlaneseq
    %v336 = vshrl.u32 %v335, 7
    %v337 = vsub.s32 0, %v336
    %v338 = vrot.slane %v128, %v337
    %v339 = vlaneseq
    %v340 = vshrl.u32 %v339, 7
    %v341 = vsub.s32 0, %v340
    %v342 = vrot.slane %v286, %v341
    %v343 = vlaneseq
    %v344 = vshrl.u32 %v343, 7
    %v345 = vsub.s32 0, %v344
    %v346 = vrot.slane %v255, %v345
    %v347 = vlaneseq
    %v348 = vshrl.u32 %v347, 7
    %v349 = vsub.s32 0, %v348
    %v350 = vrot.slane %v295, %v349
    %v351 = vlaneseq
    %v352 = vshrl.u32 %v351, 7
    %v353 = vsub.s32 0, %v352
    %v354 = vrot.slane %v256, %v353
    %v355 = vlaneseq
    %v356 = vshrl.u32 %v355, 7
    %v357 = vsub.s32 0, %v356
    %v358 = vrot.slane %v296, %v357
    %v359 = vlaneseq
    %v360 = vshrl.u32 %v359, 7
    %v361 = vsub.s32 0, %v360
    %v362 = vrot.slane %v257, %v361
    %v363 = vlaneseq
    %v364 = vshrl.u32 %v363, 7
    %v365 = vsub.s32 0, %v364
    %v366 = vrot.slane %v297, %v365
    %v367 = vlaneseq
    %v368 = vshrl.u32 %v367, 7
    %v369 = vsub.s32 0, %v368
    %v370 = vrot.slane %v258, %v369
    %v371 = vlaneseq
    %v372 = vshrl.u32 %v371, 7
    %v373 = vsub.s32 0, %v372
    %v374 = vrot.slane %v298, %v373
    %vm375 = vcmask 1041409
    %v376 = vsel %vm375, %v350, %v346
    %vm377 = vcmask 1042434
    %v378 = vsel %vm377, %v354, %v376
    %vm379 = vcmask 1043459
    %v380 = vsel %vm379, %v358, %v378
    %vm381 = vcmask 1044484
    %v382 = vsel %vm381, %v362, %v380
    %vm383 = vcmask 1045509
    %v384 = vsel %vm383, %v366, %v382
    %vm385 = vcmask 1046534
    %v386 = vsel %vm385, %v370, %v384
    %vm387 = vcmask 1047559
    %v388 = vsel %vm387, %v374, %v386
    %v390 = vmul.f32 %v314, %v388
    %v391 = vmul.f32 %v318, %v388
    %v392 = vmul.f32 %v322, %v388
    %v393 = vmul.f32 %v326, %v388
    %v394 = vmul.f32 %v330, %v388
    %v395 = vmul.f32 %v334, %v388
    %v396 = vmul.f32 %v338, %v388
    %v397 = vmul.f32 %v342, %v388
    %v398 = vlaneseq
    %v399 = vshrl.u32 %v398, 7
    %v400 = vsub.s32 1, %v399
    %v401 = vrot.slane %v117, %v400
    %v402 = vlaneseq
    %v403 = vshrl.u32 %v402, 7
    %v404 = vsub.s32 1, %v403
    %v405 = vrot.slane %v283, %v404
    %v406 = vlaneseq
    %v407 = vshrl.u32 %v406, 7
    %v408 = vsub.s32 1, %v407
    %v409 = vrot.slane %v120, %v408
    %v410 = vlaneseq
    %v411 = vshrl.u32 %v410, 7
    %v412 = vsub.s32 1, %v411
    %v413 = vrot.slane %v284, %v412
    %v414 = vlaneseq
    %v415 = vshrl.u32 %v414, 7
    %v416 = vsub.s32 1, %v415
    %v417 = vrot.slane %v125, %v416
    %v418 = vlaneseq
    %v419 = vshrl.u32 %v418, 7
    %v420 = vsub.s32 1, %v419
    %v421 = vrot.slane %v285, %v420
    %v422 = vlaneseq
    %v423 = vshrl.u32 %v422, 7
    %v424 = vsub.s32 1, %v423
    %v425 = vrot.slane %v128, %v424
    %v426 = vlaneseq
    %v427 = vshrl.u32 %v426, 7
    %v428 = vsub.s32 1, %v427
    %v429 = vrot.slane %v286, %v428
    %v430 = vlaneseq
    %v431 = vshrl.u32 %v430, 7
    %v432 = vsub.s32 1, %v431
    %v433 = vrot.slane %v255, %v432
    %v434 = vlaneseq
    %v435 = vshrl.u32 %v434, 7
    %v436 = vsub.s32 1, %v435
    %v437 = vrot.slane %v295, %v436
    %v438 = vlaneseq
    %v439 = vshrl.u32 %v438, 7
    %v440 = vsub.s32 1, %v439
    %v441 = vrot.slane %v256, %v440
    %v442 = vlaneseq
    %v443 = vshrl.u32 %v442, 7
    %v444 = vsub.s32 1, %v443
    %v445 = vrot.slane %v296, %v444
    %v446 = vlaneseq
    %v447 = vshrl.u32 %v446, 7
    %v448 = vsub.s32 1, %v447
    %v449 = vrot.slane %v257, %v448
    %v450 = vlaneseq
    %v451 = vshrl.u32 %v450, 7
    %v452 = vsub.s32 1, %v451
    %v453 = vrot.slane %v297, %v452
    %v454 = vlaneseq
    %v455 = vshrl.u32 %v454, 7
    %v456 = vsub.s32 1, %v455
    %v457 = vrot.slane %v258, %v456
    %v458 = vlaneseq
    %v459 = vshrl.u32 %v458, 7
    %v460 = vsub.s32 1, %v459
    %v461 = vrot.slane %v298, %v460
    %v462 = vsel %vm375, %v437, %v433
    %v463 = vsel %vm377, %v441, %v462
    %v464 = vsel %vm379, %v445, %v463
    %v465 = vsel %vm381, %v449, %v464
    %v466 = vsel %vm383, %v453, %v465
    %v467 = vsel %vm385, %v457, %v466
    %v468 = vsel %vm387, %v461, %v467
    %v470 = vmul.f32 %v401, %v468
    %v471 = vmul.f32 %v405, %v468
    %v472 = vmul.f32 %v409, %v468
    %v473 = vmul.f32 %v413, %v468
    %v474 = vmul.f32 %v417, %v468
    %v475 = vmul.f32 %v421, %v468
    %v476 = vmul.f32 %v425, %v468
    %v477 = vmul.f32 %v429, %v468
    %v478 = vadd.f32 %v390, %v470
    %v479 = vadd.f32 %v391, %v471
    %v480 = vadd.f32 %v392, %v472
    %v481 = vadd.f32 %v393, %v473
    %v482 = vadd.f32 %v394, %v474
    %v483 = vadd.f32 %v395, %v475
    %v484 = vadd.f32 %v396, %v476
    %v485 = vadd.f32 %v397, %v477
    %v486 = vlaneseq
    %v487 = vshrl.u32 %v486, 7
    %v488 = vsub.s32 2, %v487
    %v489 = vrot.slane %v117, %v488
    %v490 = vlaneseq
    %v491 = vshrl.u32 %v490, 7
    %v492 = vsub.s32 2, %v491
    %v493 = vrot.slane %v283, %v492
    %v494 = vlaneseq
    %v495 = vshrl.u32 %v494, 7
    %v496 = vsub.s32 2, %v495
    %v497 = vrot.slane %v120, %v496
    %v498 = vlaneseq
    %v499 = vshrl.u32 %v498, 7
    %v500 = vsub.s32 2, %v499
    %v501 = vrot.slane %v284, %v500
    %v502 = vlaneseq
    %v503 = vshrl.u32 %v502, 7
    %v504 = vsub.s32 2, %v503
    %v505 = vrot.slane %v125, %v504
    %v506 = vlaneseq
    %v507 = vshrl.u32 %v506, 7
    %v508 = vsub.s32 2, %v507
    %v509 = vrot.slane %v285, %v508
    %v510 = vlaneseq
    %v511 = vshrl.u32 %v510, 7
    %v512 = vsub.s32 2, %v511
    %v513 = vrot.slane %v128, %v512
    %v514 = vlaneseq
    %v515 = vshrl.u32 %v514, 7
    %v516 = vsub.s32 2, %v515
    %v517 = vrot.slane %v286, %v516
    %v518 = vlaneseq
    %v519 = vshrl.u32 %v518, 7
    %v520 = vsub.s32 2, %v519
    %v521 = vrot.slane %v255, %v520
    %v522 = vlaneseq
    %v523 = vshrl.u32 %v522, 7
    %v524 = vsub.s32 2, %v523
    %v525 = vrot.slane %v295, %v524
    %v526 = vlaneseq
    %v527 = vshrl.u32 %v526, 7
    %v528 = vsub.s32 2, %v527
    %v529 = vrot.slane %v256, %v528
    %v530 = vlaneseq
    %v531 = vshrl.u32 %v530, 7
    %v532 = vsub.s32 2, %v531
    %v533 = vrot.slane %v296, %v532
    %v534 = vlaneseq
    %v535 = vshrl.u32 %v534, 7
    %v536 = vsub.s32 2, %v535
    %v537 = vrot.slane %v257, %v536
    %v538 = vlaneseq
    %v539 = vshrl.u32 %v538, 7
    %v540 = vsub.s32 2, %v539
    %v541 = vrot.slane %v297, %v540
    %v542 = vlaneseq
    %v543 = vshrl.u32 %v542, 7
    %v544 = vsub.s32 2, %v543
    %v545 = vrot.slane %v258, %v544
    %v546 = vlaneseq
    %v547 = vshrl.u32 %v546, 7
    %v548 = vsub.s32 2, %v547
    %v549 = vrot.slane %v298, %v548
    %v550 = vsel %vm375, %v525, %v521
    %v551 = vsel %vm377, %v529, %v550
    %v552 = vsel %vm379, %v533, %v551
    %v553 = vsel %vm381, %v537, %v552
    %v554 = vsel %vm383, %v541, %v553
    %v555 = vsel %vm385, %v545, %v554
    %v556 = vsel %vm387, %v549, %v555
    %v558 = vmul.f32 %v489, %v556
    %v559 = vmul.f32 %v493, %v556
    %v560 = vmul.f32 %v497, %v556
    %v561 = vmul.f32 %v501, %v556
    %v562 = vmul.f32 %v505, %v556
    %v563 = vmul.f32 %v509, %v556
    %v564 = vmul.f32 %v513, %v556
    %v565 = vmul.f32 %v517, %v556
    %v566 = vadd.f32 %v478, %v558
    %v567 = vadd.f32 %v479, %v559
    %v568 = vadd.f32 %v480, %v560
    %v569 = vadd.f32 %v481, %v561
    %v570 = vadd.f32 %v482, %v562
    %v571 = vadd.f32 %v483, %v563
    %v572 = vadd.f32 %v484, %v564
    %v573 = vadd.f32 %v485, %v565
    %v574 = vlaneseq
    %v575 = vshrl.u32 %v574, 7
    %v576 = vsub.s32 3, %v575
    %v577 = vrot.slane %v117, %v576
    %v578 = vlaneseq
    %v579 = vshrl.u32 %v578, 7
    %v580 = vsub.s32 3, %v579
    %v581 = vrot.slane %v283, %v580
    %v582 = vlaneseq
    %v583 = vshrl.u32 %v582, 7
    %v584 = vsub.s32 3, %v583
    %v585 = vrot.slane %v120, %v584
    %v586 = vlaneseq
    %v587 = vshrl.u32 %v586, 7
    %v588 = vsub.s32 3, %v587
    %v589 = vrot.slane %v284, %v588
    %v590 = vlaneseq
    %v591 = vshrl.u32 %v590, 7
    %v592 = vsub.s32 3, %v591
    %v593 = vrot.slane %v125, %v592
    %v594 = vlaneseq
    %v595 = vshrl.u32 %v594, 7
    %v596 = vsub.s32 3, %v595
    %v597 = vrot.slane %v285, %v596
    %v598 = vlaneseq
    %v599 = vshrl.u32 %v598, 7
    %v600 = vsub.s32 3, %v599
    %v601 = vrot.slane %v128, %v600
    %v602 = vlaneseq
    %v603 = vshrl.u32 %v602, 7
    %v604 = vsub.s32 3, %v603
    %v605 = vrot.slane %v286, %v604
    %v606 = vlaneseq
    %v607 = vshrl.u32 %v606, 7
    %v608 = vsub.s32 3, %v607
    %v609 = vrot.slane %v255, %v608
    %v610 = vlaneseq
    %v611 = vshrl.u32 %v610, 7
    %v612 = vsub.s32 3, %v611
    %v613 = vrot.slane %v295, %v612
    %v614 = vlaneseq
    %v615 = vshrl.u32 %v614, 7
    %v616 = vsub.s32 3, %v615
    %v617 = vrot.slane %v256, %v616
    %v618 = vlaneseq
    %v619 = vshrl.u32 %v618, 7
    %v620 = vsub.s32 3, %v619
    %v621 = vrot.slane %v296, %v620
    %v622 = vlaneseq
    %v623 = vshrl.u32 %v622, 7
    %v624 = vsub.s32 3, %v623
    %v625 = vrot.slane %v257, %v624
    %v626 = vlaneseq
    %v627 = vshrl.u32 %v626, 7
    %v628 = vsub.s32 3, %v627
    %v629 = vrot.slane %v297, %v628
    %v630 = vlaneseq
    %v631 = vshrl.u32 %v630, 7
    %v632 = vsub.s32 3, %v631
    %v633 = vrot.slane %v258, %v632
    %v634 = vlaneseq
    %v635 = vshrl.u32 %v634, 7
    %v636 = vsub.s32 3, %v635
    %v637 = vrot.slane %v298, %v636
    %v638 = vsel %vm375, %v613, %v609
    %v639 = vsel %vm377, %v617, %v638
    %v640 = vsel %vm379, %v621, %v639
    %v641 = vsel %vm381, %v625, %v640
    %v642 = vsel %vm383, %v629, %v641
    %v643 = vsel %vm385, %v633, %v642
    %v644 = vsel %vm387, %v637, %v643
    %v646 = vmul.f32 %v577, %v644
    %v647 = vmul.f32 %v581, %v644
    %v648 = vmul.f32 %v585, %v644
    %v649 = vmul.f32 %v589, %v644
    %v650 = vmul.f32 %v593, %v644
    %v651 = vmul.f32 %v597, %v644
    %v652 = vmul.f32 %v601, %v644
    %v653 = vmul.f32 %v605, %v644
    %v654 = vadd.f32 %v566, %v646
    %v655 = vadd.f32 %v567, %v647
    %v656 = vadd.f32 %v568, %v648
    %v657 = vadd.f32 %v569, %v649
    %v658 = vadd.f32 %v570, %v650
    %v659 = vadd.f32 %v571, %v651
    %v660 = vadd.f32 %v572, %v652
    %v661 = vadd.f32 %v573, %v653
    %vm662 = vcmask 130048
    %v663 = vsel %vm662, %v654, -inf
    %v664 = vrot.slane %v663, 4
    %v665 = vmax.f32 %v663, %v664
    %v666 = vrot.slane %v665, 2
    %v667 = vmax.f32 %v665, %v666
    %v668 = vrot.slane %v667, 1
    %v669 = vmax.f32 %v667, %v668
    %v670 = vsel %vm662, %v655, -inf
    %v671 = vrot.slane %v670, 4
    %v672 = vmax.f32 %v670, %v671
    %v673 = vrot.slane %v672, 2
    %v674 = vmax.f32 %v672, %v673
    %v675 = vrot.slane %v674, 1
    %v676 = vmax.f32 %v674, %v675
    %v677 = vsel %vm662, %v656, -inf
    %v678 = vrot.slane %v677, 4
    %v679 = vmax.f32 %v677, %v678
    %v680 = vrot.slane %v679, 2
    %v681 = vmax.f32 %v679, %v680
    %v682 = vrot.slane %v681, 1
    %v683 = vmax.f32 %v681, %v682
    %v684 = vsel %vm662, %v657, -inf
    %v685 = vrot.slane %v684, 4
    %v686 = vmax.f32 %v684, %v685
    %v687 = vrot.slane %v686, 2
    %v688 = vmax.f32 %v686, %v687
    %v689 = vrot.slane %v688, 1
    %v690 = vmax.f32 %v688, %v689
    %v691 = vsel %vm662, %v658, -inf
    %v692 = vrot.slane %v691, 4
    %v693 = vmax.f32 %v691, %v692
    %v694 = vrot.slane %v693, 2
    %v695 = vmax.f32 %v693, %v694
    %v696 = vrot.slane %v695, 1
    %v697 = vmax.f32 %v695, %v696
    %v698 = vsel %vm662, %v659, -inf
    %v699 = vrot.slane %v698, 4
    %v700 = vmax.f32 %v698, %v699
    %v701 = vrot.slane %v700, 2
    %v702 = vmax.f32 %v700, %v701
    %v703 = vrot.slane %v702, 1
    %v704 = vmax.f32 %v702, %v703
    %v705 = vsel %vm662, %v660, -inf
    %v706 = vrot.slane %v705, 4
    %v707 = vmax.f32 %v705, %v706
    %v708 = vrot.slane %v707, 2
    %v709 = vmax.f32 %v707, %v708
    %v710 = vrot.slane %v709, 1
    %v711 = vmax.f32 %v709, %v710
    %v712 = vsel %vm662, %v661, -inf
    %v713 = vrot.slane %v712, 4
    %v714 = vmax.f32 %v712, %v713
    %v715 = vrot.slane %v714, 2
    %v716 = vmax.f32 %v714, %v715
    %v717 = vrot.slane %v716, 1
    %v718 = vmax.f32 %v716, %v717
    %v719 = vsub.f32 %v654, %v669
    %v720 = vsub.f32 %v655, %v676
    %v721 = vsub.f32 %v656, %v683
    %v722 = vsub.f32 %v657, %v690
    %v723 = vsub.f32 %v658, %v697
    %v724 = vsub.f32 %v659, %v704
    %v725 = vsub.f32 %v660, %v711
    %v726 = vsub.f32 %v661, %v718
    %v727 = vmul.f32 %v719, 1.442695
    %v728 = vpow.pop %v727
    %v729 = vmul.f32 %v720, 1.442695
    %v730 = vpow.pop %v729
    %v731 = vmul.f32 %v721, 1.442695
    %v732 = vpow.pop %v731
    %v733 = vmul.f32 %v722, 1.442695
    %v734 = vpow.pop %v733
    %v735 = vmul.f32 %v723, 1.442695
    %v736 = vpow.pop %v735
    %v737 = vmul.f32 %v724, 1.442695
    %v738 = vpow.pop %v737
    %v739 = vmul.f32 %v725, 1.442695
    %v740 = vpow.pop %v739
    %v741 = vmul.f32 %v726, 1.442695
    %v742 = vpow.pop %v741
    %v743 = vsel %vm662, %v728, 0.0
    %v744 = vrot.slane %v743, 4
    %v745 = vadd.f32 %v743, %v744
    %v746 = vrot.slane %v745, 2
    %v747 = vadd.f32 %v745, %v746
    %v748 = vrot.slane %v747, 1
    %v749 = vadd.f32 %v747, %v748
    %v750 = vsel %vm662, %v730, 0.0
    %v751 = vrot.slane %v750, 4
    %v752 = vadd.f32 %v750, %v751
    %v753 = vrot.slane %v752, 2
    %v754 = vadd.f32 %v752, %v753
    %v755 = vrot.slane %v754, 1
    %v756 = vadd.f32 %v754, %v755
    %v757 = vsel %vm662, %v732, 0.0
    %v758 = vrot.slane %v757, 4
    %v759 = vadd.f32 %v757, %v758
    %v760 = vrot.slane %v759, 2
    %v761 = vadd.f32 %v759, %v760
    %v762 = vrot.slane %v761, 1
    %v763 = vadd.f32 %v761, %v762
    %v764 = vsel %vm662, %v734, 0.0
    %v765 = vrot.slane %v764, 4
    %v766 = vadd.f32 %v764, %v765
    %v767 = vrot.slane %v766, 2
    %v768 = vadd.f32 %v766, %v767
    %v769 = vrot.slane %v768, 1
    %v770 = vadd.f32 %v768, %v769
    %v771 = vsel %vm662, %v736, 0.0
    %v772 = vrot.slane %v771, 4
    %v773 = vadd.f32 %v771, %v772
    %v774 = vrot.slane %v773, 2
    %v775 = vadd.f32 %v773, %v774
    %v776 = vrot.slane %v775, 1
    %v777 = vadd.f32 %v775, %v776
    %v778 = vsel %vm662, %v738, 0.0
    %v779 = vrot.slane %v778, 4
    %v780 = vadd.f32 %v778, %v779
    %v781 = vrot.slane %v780, 2
    %v782 = vadd.f32 %v780, %v781
    %v783 = vrot.slane %v782, 1
    %v784 = vadd.f32 %v782, %v783
    %v785 = vsel %vm662, %v740, 0.0
    %v786 = vrot.slane %v785, 4
    %v787 = vadd.f32 %v785, %v786
    %v788 = vrot.slane %v787, 2
    %v789 = vadd.f32 %v787, %v788
    %v790 = vrot.slane %v789, 1
    %v791 = vadd.f32 %v789, %v790
    %v792 = vsel %vm662, %v742, 0.0
    %v793 = vrot.slane %v792, 4
    %v794 = vadd.f32 %v792, %v793
    %v795 = vrot.slane %v794, 2
    %v796 = vadd.f32 %v794, %v795
    %v797 = vrot.slane %v796, 1
    %v798 = vadd.f32 %v796, %v797
    %v799 = vrcp.pop %v749
    %v800 = vrcp.pop %v756
    %v801 = vrcp.pop %v763
    %v802 = vrcp.pop %v770
    %v803 = vrcp.pop %v777
    %v804 = vrcp.pop %v784
    %v805 = vrcp.pop %v791
    %v806 = vrcp.pop %v798
    %v807 = vmul.f32 %v728, %v799
    %v808 = vmul.f32 %v730, %v800
    %v809 = vmul.f32 %v732, %v801
    %v810 = vmul.f32 %v734, %v802
    %v811 = vmul.f32 %v736, %v803
    %v812 = vmul.f32 %v738, %v804
    %v813 = vmul.f32 %v740, %v805
    %v814 = vmul.f32 %v742, %v806
    %v815 = vlaneseq
    %v816 = vshrl.u32 %v815, 7
    %v817 = vsub.s32 0, %v816
    %v818 = vrot.slane %v807, %v817
    %v819 = vlaneseq
    %v820 = vshrl.u32 %v819, 7
    %v821 = vsub.s32 0, %v820
    %v822 = vrot.slane %v808, %v821
    %v823 = vlaneseq
    %v824 = vshrl.u32 %v823, 7
    %v825 = vsub.s32 0, %v824
    %v826 = vrot.slane %v809, %v825
    %v827 = vlaneseq
    %v828 = vshrl.u32 %v827, 7
    %v829 = vsub.s32 0, %v828
    %v830 = vrot.slane %v810, %v829
    %v831 = vlaneseq
    %v832 = vshrl.u32 %v831, 7
    %v833 = vsub.s32 0, %v832
    %v834 = vrot.slane %v811, %v833
    %v835 = vlaneseq
    %v836 = vshrl.u32 %v835, 7
    %v837 = vsub.s32 0, %v836
    %v838 = vrot.slane %v812, %v837
    %v839 = vlaneseq
    %v840 = vshrl.u32 %v839, 7
    %v841 = vsub.s32 0, %v840
    %v842 = vrot.slane %v813, %v841
    %v843 = vlaneseq
    %v844 = vshrl.u32 %v843, 7
    %v845 = vsub.s32 0, %v844
    %v846 = vrot.slane %v814, %v845
    %v847 = vmul.f32 %v818, %v275
    %v848 = vmul.f32 %v822, %v275
    %v849 = vmul.f32 %v826, %v275
    %v850 = vmul.f32 %v830, %v275
    %v851 = vmul.f32 %v834, %v275
    %v852 = vmul.f32 %v838, %v275
    %v853 = vmul.f32 %v842, %v275
    %v854 = vmul.f32 %v846, %v275
    %v855 = vlaneseq
    %v856 = vshrl.u32 %v855, 7
    %v857 = vsub.s32 1, %v856
    %v858 = vrot.slane %v807, %v857
    %v859 = vlaneseq
    %v860 = vshrl.u32 %v859, 7
    %v861 = vsub.s32 1, %v860
    %v862 = vrot.slane %v808, %v861
    %v863 = vlaneseq
    %v864 = vshrl.u32 %v863, 7
    %v865 = vsub.s32 1, %v864
    %v866 = vrot.slane %v809, %v865
    %v867 = vlaneseq
    %v868 = vshrl.u32 %v867, 7
    %v869 = vsub.s32 1, %v868
    %v870 = vrot.slane %v810, %v869
    %v871 = vlaneseq
    %v872 = vshrl.u32 %v871, 7
    %v873 = vsub.s32 1, %v872
    %v874 = vrot.slane %v811, %v873
    %v875 = vlaneseq
    %v876 = vshrl.u32 %v875, 7
    %v877 = vsub.s32 1, %v876
    %v878 = vrot.slane %v812, %v877
    %v879 = vlaneseq
    %v880 = vshrl.u32 %v879, 7
    %v881 = vsub.s32 1, %v880
    %v882 = vrot.slane %v813, %v881
    %v883 = vlaneseq
    %v884 = vshrl.u32 %v883, 7
    %v885 = vsub.s32 1, %v884
    %v886 = vrot.slane %v814, %v885
    %v887 = vmul.f32 %v858, %v303
    %v888 = vmul.f32 %v862, %v303
    %v889 = vmul.f32 %v866, %v303
    %v890 = vmul.f32 %v870, %v303
    %v891 = vmul.f32 %v874, %v303
    %v892 = vmul.f32 %v878, %v303
    %v893 = vmul.f32 %v882, %v303
    %v894 = vmul.f32 %v886, %v303
    %v895 = vadd.f32 %v847, %v887
    %v896 = vadd.f32 %v848, %v888
    %v897 = vadd.f32 %v849, %v889
    %v898 = vadd.f32 %v850, %v890
    %v899 = vadd.f32 %v851, %v891
    %v900 = vadd.f32 %v852, %v892
    %v901 = vadd.f32 %v853, %v893
    %v902 = vadd.f32 %v854, %v894
    %v903 = vlaneseq
    %v904 = vshrl.u32 %v903, 7
    %v905 = vsub.s32 2, %v904
    %v906 = vrot.slane %v807, %v905
    %v907 = vlaneseq
    %v908 = vshrl.u32 %v907, 7
    %v909 = vsub.s32 2, %v908
    %v910 = vrot.slane %v808, %v909
    %v911 = vlaneseq
    %v912 = vshrl.u32 %v911, 7
    %v913 = vsub.s32 2, %v912
    %v914 = vrot.slane %v809, %v913
    %v915 = vlaneseq
    %v916 = vshrl.u32 %v915, 7
    %v917 = vsub.s32 2, %v916
    %v918 = vrot.slane %v810, %v917
    %v919 = vlaneseq
    %v920 = vshrl.u32 %v919, 7
    %v921 = vsub.s32 2, %v920
    %v922 = vrot.slane %v811, %v921
    %v923 = vlaneseq
    %v924 = vshrl.u32 %v923, 7
    %v925 = vsub.s32 2, %v924
    %v926 = vrot.slane %v812, %v925
    %v927 = vlaneseq
    %v928 = vshrl.u32 %v927, 7
    %v929 = vsub.s32 2, %v928
    %v930 = vrot.slane %v813, %v929
    %v931 = vlaneseq
    %v932 = vshrl.u32 %v931, 7
    %v933 = vsub.s32 2, %v932
    %v934 = vrot.slane %v814, %v933
    %v935 = vmul.f32 %v906, %v276
    %v936 = vmul.f32 %v910, %v276
    %v937 = vmul.f32 %v914, %v276
    %v938 = vmul.f32 %v918, %v276
    %v939 = vmul.f32 %v922, %v276
    %v940 = vmul.f32 %v926, %v276
    %v941 = vmul.f32 %v930, %v276
    %v942 = vmul.f32 %v934, %v276
    %v943 = vadd.f32 %v895, %v935
    %v944 = vadd.f32 %v896, %v936
    %v945 = vadd.f32 %v897, %v937
    %v946 = vadd.f32 %v898, %v938
    %v947 = vadd.f32 %v899, %v939
    %v948 = vadd.f32 %v900, %v940
    %v949 = vadd.f32 %v901, %v941
    %v950 = vadd.f32 %v902, %v942
    %v951 = vlaneseq
    %v952 = vshrl.u32 %v951, 7
    %v953 = vsub.s32 3, %v952
    %v954 = vrot.slane %v807, %v953
    %v955 = vlaneseq
    %v956 = vshrl.u32 %v955, 7
    %v957 = vsub.s32 3, %v956
    %v958 = vrot.slane %v808, %v957
    %v959 = vlaneseq
    %v960 = vshrl.u32 %v959, 7
    %v961 = vsub.s32 3, %v960
    %v962 = vrot.slane %v809, %v961
    %v963 = vlaneseq
    %v964 = vshrl.u32 %v963, 7
    %v965 = vsub.s32 3, %v964
    %v966 = vrot.slane %v810, %v965
    %v967 = vlaneseq
    %v968 = vshrl.u32 %v967, 7
    %v969 = vsub.s32 3, %v968
    %v970 = vrot.slane %v811, %v969
    %v971 = vlaneseq
    %v972 = vshrl.u32 %v971, 7
    %v973 = vsub.s32 3, %v972
    %v974 = vrot.slane %v812, %v973
    %v975 = vlaneseq
    %v976 = vshrl.u32 %v975, 7
    %v977 = vsub.s32 3, %v976
    %v978 = vrot.slane %v813, %v977
    %v979 = vlaneseq
    %v980 = vshrl.u32 %v979, 7
    %v981 = vsub.s32 3, %v980
    %v982 = vrot.slane %v814, %v981
    %v983 = vmul.f32 %v954, %v304
    %v984 = vmul.f32 %v958, %v304
    %v985 = vmul.f32 %v962, %v304
    %v986 = vmul.f32 %v966, %v304
    %v987 = vmul.f32 %v970, %v304
    %v988 = vmul.f32 %v974, %v304
    %v989 = vmul.f32 %v978, %v304
    %v990 = vmul.f32 %v982, %v304
    %v991 = vadd.f32 %v943, %v983
    %v992 = vadd.f32 %v944, %v984
    %v993 = vadd.f32 %v945, %v985
    %v994 = vadd.f32 %v946, %v986
    %v995 = vadd.f32 %v947, %v987
    %v996 = vadd.f32 %v948, %v988
    %v997 = vadd.f32 %v949, %v989
    %v998 = vadd.f32 %v950, %v990
    %v999 = vlaneseq
    %v1000 = vshrl.u32 %v999, 7
    %v1001 = vsub.s32 4, %v1000
    %v1002 = vrot.slane %v807, %v1001
    %v1003 = vlaneseq
    %v1004 = vshrl.u32 %v1003, 7
    %v1005 = vsub.s32 4, %v1004
    %v1006 = vrot.slane %v808, %v1005
    %v1007 = vlaneseq
    %v1008 = vshrl.u32 %v1007, 7
    %v1009 = vsub.s32 4, %v1008
    %v1010 = vrot.slane %v809, %v1009
    %v1011 = vlaneseq
    %v1012 = vshrl.u32 %v1011, 7
    %v1013 = vsub.s32 4, %v1012
    %v1014 = vrot.slane %v810, %v1013
    %v1015 = vlaneseq
    %v1016 = vshrl.u32 %v1015, 7
    %v1017 = vsub.s32 4, %v1016
    %v1018 = vrot.slane %v811, %v1017
    %v1019 = vlaneseq
    %v1020 = vshrl.u32 %v1019, 7
    %v1021 = vsub.s32 4, %v1020
    %v1022 = vrot.slane %v812, %v1021
    %v1023 = vlaneseq
    %v1024 = vshrl.u32 %v1023, 7
    %v1025 = vsub.s32 4, %v1024
    %v1026 = vrot.slane %v813, %v1025
    %v1027 = vlaneseq
    %v1028 = vshrl.u32 %v1027, 7
    %v1029 = vsub.s32 4, %v1028
    %v1030 = vrot.slane %v814, %v1029
    %v1031 = vmul.f32 %v1002, %v277
    %v1032 = vmul.f32 %v1006, %v277
    %v1033 = vmul.f32 %v1010, %v277
    %v1034 = vmul.f32 %v1014, %v277
    %v1035 = vmul.f32 %v1018, %v277
    %v1036 = vmul.f32 %v1022, %v277
    %v1037 = vmul.f32 %v1026, %v277
    %v1038 = vmul.f32 %v1030, %v277
    %v1039 = vadd.f32 %v991, %v1031
    %v1040 = vadd.f32 %v992, %v1032
    %v1041 = vadd.f32 %v993, %v1033
    %v1042 = vadd.f32 %v994, %v1034
    %v1043 = vadd.f32 %v995, %v1035
    %v1044 = vadd.f32 %v996, %v1036
    %v1045 = vadd.f32 %v997, %v1037
    %v1046 = vadd.f32 %v998, %v1038
    %v1047 = vlaneseq
    %v1048 = vshrl.u32 %v1047, 7
    %v1049 = vsub.s32 5, %v1048
    %v1050 = vrot.slane %v807, %v1049
    %v1051 = vlaneseq
    %v1052 = vshrl.u32 %v1051, 7
    %v1053 = vsub.s32 5, %v1052
    %v1054 = vrot.slane %v808, %v1053
    %v1055 = vlaneseq
    %v1056 = vshrl.u32 %v1055, 7
    %v1057 = vsub.s32 5, %v1056
    %v1058 = vrot.slane %v809, %v1057
    %v1059 = vlaneseq
    %v1060 = vshrl.u32 %v1059, 7
    %v1061 = vsub.s32 5, %v1060
    %v1062 = vrot.slane %v810, %v1061
    %v1063 = vlaneseq
    %v1064 = vshrl.u32 %v1063, 7
    %v1065 = vsub.s32 5, %v1064
    %v1066 = vrot.slane %v811, %v1065
    %v1067 = vlaneseq
    %v1068 = vshrl.u32 %v1067, 7
    %v1069 = vsub.s32 5, %v1068
    %v1070 = vrot.slane %v812, %v1069
    %v1071 = vlaneseq
    %v1072 = vshrl.u32 %v1071, 7
    %v1073 = vsub.s32 5, %v1072
    %v1074 = vrot.slane %v813, %v1073
    %v1075 = vlaneseq
    %v1076 = vshrl.u32 %v1075, 7
    %v1077 = vsub.s32 5, %v1076
    %v1078 = vrot.slane %v814, %v1077
    %v1079 = vmul.f32 %v1050, %v305
    %v1080 = vmul.f32 %v1054, %v305
    %v1081 = vmul.f32 %v1058, %v305
    %v1082 = vmul.f32 %v1062, %v305
    %v1083 = vmul.f32 %v1066, %v305
    %v1084 = vmul.f32 %v1070, %v305
    %v1085 = vmul.f32 %v1074, %v305
    %v1086 = vmul.f32 %v1078, %v305
    %v1087 = vadd.f32 %v1039, %v1079
    %v1088 = vadd.f32 %v1040, %v1080
    %v1089 = vadd.f32 %v1041, %v1081
    %v1090 = vadd.f32 %v1042, %v1082
    %v1091 = vadd.f32 %v1043, %v1083
    %v1092 = vadd.f32 %v1044, %v1084
    %v1093 = vadd.f32 %v1045, %v1085
    %v1094 = vadd.f32 %v1046, %v1086
    %v1095 = vlaneseq
    %v1096 = vshrl.u32 %v1095, 7
    %v1097 = vsub.s32 6, %v1096
    %v1098 = vrot.slane %v807, %v1097
    %v1099 = vlaneseq
    %v1100 = vshrl.u32 %v1099, 7
    %v1101 = vsub.s32 6, %v1100
    %v1102 = vrot.slane %v808, %v1101
    %v1103 = vlaneseq
    %v1104 = vshrl.u32 %v1103, 7
    %v1105 = vsub.s32 6, %v1104
    %v1106 = vrot.slane %v809, %v1105
    %v1107 = vlaneseq
    %v1108 = vshrl.u32 %v1107, 7
    %v1109 = vsub.s32 6, %v1108
    %v1110 = vrot.slane %v810, %v1109
    %v1111 = vlaneseq
    %v1112 = vshrl.u32 %v1111, 7
    %v1113 = vsub.s32 6, %v1112
    %v1114 = vrot.slane %v811, %v1113
    %v1115 = vlaneseq
    %v1116 = vshrl.u32 %v1115, 7
    %v1117 = vsub.s32 6, %v1116
    %v1118 = vrot.slane %v812, %v1117
    %v1119 = vlaneseq
    %v1120 = vshrl.u32 %v1119, 7
    %v1121 = vsub.s32 6, %v1120
    %v1122 = vrot.slane %v813, %v1121
    %v1123 = vlaneseq
    %v1124 = vshrl.u32 %v1123, 7
    %v1125 = vsub.s32 6, %v1124
    %v1126 = vrot.slane %v814, %v1125
    %v1127 = vmul.f32 %v1098, %v278
    %v1128 = vmul.f32 %v1102, %v278
    %v1129 = vmul.f32 %v1106, %v278
    %v1130 = vmul.f32 %v1110, %v278
    %v1131 = vmul.f32 %v1114, %v278
    %v1132 = vmul.f32 %v1118, %v278
    %v1133 = vmul.f32 %v1122, %v278
    %v1134 = vmul.f32 %v1126, %v278
    %v1135 = vadd.f32 %v1087, %v1127
    %v1136 = vadd.f32 %v1088, %v1128
    %v1137 = vadd.f32 %v1089, %v1129
    %v1138 = vadd.f32 %v1090, %v1130
    %v1139 = vadd.f32 %v1091, %v1131
    %v1140 = vadd.f32 %v1092, %v1132
    %v1141 = vadd.f32 %v1093, %v1133
    %v1142 = vadd.f32 %v1094, %v1134
    %v1143 = vlaneseq
    %v1144 = vshrl.u32 %v1143, 7
    %v1145 = vsub.s32 7, %v1144
    %v1146 = vrot.slane %v807, %v1145
    %v1147 = vlaneseq
    %v1148 = vshrl.u32 %v1147, 7
    %v1149 = vsub.s32 7, %v1148
    %v1150 = vrot.slane %v808, %v1149
    %v1151 = vlaneseq
    %v1152 = vshrl.u32 %v1151, 7
    %v1153 = vsub.s32 7, %v1152
    %v1154 = vrot.slane %v809, %v1153
    %v1155 = vlaneseq
    %v1156 = vshrl.u32 %v1155, 7
    %v1157 = vsub.s32 7, %v1156
    %v1158 = vrot.slane %v810, %v1157
    %v1159 = vlaneseq
    %v1160 = vshrl.u32 %v1159, 7
    %v1161 = vsub.s32 7, %v1160
    %v1162 = vrot.slane %v811, %v1161
    %v1163 = vlaneseq
    %v1164 = vshrl.u32 %v1163, 7
    %v1165 = vsub.s32 7, %v1164
    %v1166 = vrot.slane %v812, %v1165
    %v1167 = vlaneseq
    %v1168 = vshrl.u32 %v1167, 7
    %v1169 = vsub.s32 7, %v1168
    %v1170 = vrot.slane %v813, %v1169
    %v1171 = vlaneseq
    %v1172 = vshrl.u32 %v1171, 7
    %v1173 = vsub.s32 7, %v1172
    %v1174 = vrot.slane %v814, %v1173
    %v1175 = vmul.f32 %v1146, %v306
    %v1176 = vmul.f32 %v1150, %v306
    %v1177 = vmul.f32 %v1154, %v306
    %v1178 = vmul.f32 %v1158, %v306
    %v1179 = vmul.f32 %v1162, %v306
    %v1180 = vmul.f32 %v1166, %v306
    %v1181 = vmul.f32 %v1170, %v306
    %v1182 = vmul.f32 %v1174, %v306
    %v1183 = vadd.f32 %v1135, %v1175
    %v1184 = vadd.f32 %v1136, %v1176
    %v1185 = vadd.f32 %v1137, %v1177
    %v1186 = vadd.f32 %v1138, %v1178
    %v1187 = vadd.f32 %v1139, %v1179
    %v1188 = vadd.f32 %v1140, %v1180
    %v1189 = vadd.f32 %v1141, %v1181
    %v1190 = vadd.f32 %v1142, %v1182
    %v1199 = vcombine.low %v1183, %v1184
    %v1200 = vcombine.low %v1185, %v1186
    %v1201 = vcombine.low %v1187, %v1188
    %v1202 = vcombine.low %v1189, %v1190
    %v1207 = vpack.c.bf16 %v1200, %v1199
    %v1208 = vpack.c.bf16 %v1202, %v1201
    %v1209 = vld [vmem:[%s4] sm:$0xf]
    %v1210 = vld [vmem:[%s4 + $0x4] sm:$0xf]
    %v1211 = vld [vmem:[%s4 + $0x8] sm:$0xf]
    %v1212 = vld [vmem:[%s4 + $0xc] sm:$0xf]
    %v1213 = vld [vmem:[%s6] sm:$0x1]
    %v1214 = vlaneseq
    %v1215 = vshrl.u32 %v1214, 7
    %v1216 = vsub.s32 0, %v1215
    %v1217 = vrot.slane %v1213, %v1216
    %1218 = vxpose.xlu0.c.b16.start [1/8] %v1207, 128
    %1219 = vxpose.xlu0.c.b16.cont [2/8] %v1208, 128
    %1220 = vxpose.xlu0.c.b16.cont [3/8] 0, 128
    %1221 = vxpose.xlu0.c.b16.cont [4/8] 0, 128
    %1222 = vxpose.xlu0.c.b16.cont [5/8] 0, 128
    %1223 = vxpose.xlu0.c.b16.cont [6/8] 0, 128
    %1224 = vxpose.xlu0.c.b16.cont [7/8] 0, 128
    %1225 = vxpose.xlu0.c.b16.end [8/8] 0, 128
    %v1226 = vpop.trf.xlu0
    %v1227 = vpop.trf.xlu0
    %v1228 = vpop.trf.xlu0
    %v1229 = vpop.trf.xlu0
    %v1230 = vpop.trf.xlu0
    %v1231 = vpop.trf.xlu0
    %v1232 = vpop.trf.xlu0
    %v1233 = vpop.trf.xlu0
    %v1238 = vunpack.c.l.b16 %v1209
    %v1239 = vunpack.c.l.b16 %v1210
    %v1240 = vunpack.c.l.b16 %v1211
    %v1241 = vunpack.c.l.b16 %v1212
    %v1242 = vpack.c.b16 %v1239, %v1238
    %v1243 = vpack.c.b16 %v1241, %v1240
    %v1247 = vsel %vm72, %v1226, 0
    %1249 = vmatprep.subr.bf16.mxu0 0
    %1250 = vmatpush1.bf16.msra.mxu0 %v1242
    %1251 = vmatprep.subr.bf16.mxu0 0
    %1252 = vmatpush1.bf16.msra.mxu0 %v1243
    %1253 = vmatprep.subr.bf16.mxu0 0
    %1254 = vmatpush1.bf16.msra.mxu0 0
    %1255 = vmatprep.subr.bf16.mxu0 0
    %1256 = vmatpush1.bf16.msra.mxu0 0
    %1257 = vmatprep.subr.bf16.mxu0 0
    %1258 = vmatpush1.bf16.msra.mxu0 0
    %1259 = vmatprep.subr.bf16.mxu0 0
    %1260 = vmatpush1.bf16.msra.mxu0 0
    %1261 = vmatprep.subr.bf16.mxu0 0
    %1262 = vmatpush1.bf16.msra.mxu0 0
    %1263 = vmatprep.subr.bf16.mxu0 0
    %1264 = vmatpush1.bf16.msra.mxu0 0
    %1265 = vmatprep.subr.bf16.mxu0 0
    %1266 = vmatpush1.bf16.msra.mxu0 0
    %1267 = vmatprep.subr.bf16.mxu0 0
    %1268 = vmatpush1.bf16.msra.mxu0 0
    %1269 = vmatprep.subr.bf16.mxu0 0
    %1270 = vmatpush1.bf16.msra.mxu0 0
    %1271 = vmatprep.subr.bf16.mxu0 0
    %1272 = vmatpush1.bf16.msra.mxu0 0
    %1273 = vmatprep.subr.bf16.mxu0 0
    %1274 = vmatpush1.bf16.msra.mxu0 0
    %1275 = vmatprep.subr.bf16.mxu0 0
    %1276 = vmatpush1.bf16.msra.mxu0 0
    %1277 = vmatprep.subr.bf16.mxu0 0
    %1278 = vmatpush1.bf16.msra.mxu0 0
    %1279 = vmatprep.subr.bf16.mxu0 0
    %1280 = vmatpush1.bf16.msra.mxu0 0
    %1281 = vmatprep.mubr.bf16.mxu0 0
    %1282 = vmatmul.mubr.bf16.gmra.mrb[0].mxu0 %v1247
    %v1283 = vpop.f32.mrb[0].mxu0
    %v1284 = vadd.f32 %v1217, %v1283
    %v1285 = vpop.f32.mrb[0].mxu0
    %v1286 = vpop.f32.mrb[0].mxu0
    %v1287 = vadd.f32 %v1217, %v1286
    %v1288 = vpop.f32.mrb[0].mxu0
    %1289 = vdwg.mxu0
    %v1290 = vadd.f32 %v28, %v1284
    %v1291 = vadd.f32 %v29, %v1287
    %v1292 = vld [vmem:[%s6 + $0x1] sm:$0x1]
    %v1293 = vld [vmem:[%s6 + $0x2] sm:$0x1]
    %v1294 = vsel %vm72, %v1290, 0.0
    %1295 = vadd.xlane.f32.xlu0 %v1294
    %v1296 = vpop.xlane.xlu0 %1295
    %v1297 = vsel %vm72, %v1291, 0.0
    %1298 = vadd.xlane.f32.xlu0 %v1297
    %v1299 = vpop.xlane.xlu0 %1298
    %v1300 = vrcp.pop 32.0
    %v1301 = vmul.f32 %v1296, %v1300
    %v1302 = vmul.f32 %v1299, %v1300
    %v1303 = vsub.f32 %v1290, %v1301
    %v1304 = vsub.f32 %v1291, %v1302
    %v1305 = vmul.f32 %v1303, %v1303
    %v1306 = vmul.f32 %v1304, %v1304
    %v1307 = vsel %vm72, %v1305, 0.0
    %1308 = vadd.xlane.f32.xlu0 %v1307
    %v1309 = vpop.xlane.xlu0 %1308
    %v1310 = vsel %vm72, %v1306, 0.0
    %1311 = vadd.xlane.f32.xlu0 %v1310
    %v1312 = vpop.xlane.xlu0 %1311
    %v1313 = vmul.f32 %v1309, %v1300
    %v1314 = vmul.f32 %v1312, %v1300
    %v1315 = vadd.f32 %v1313, 1e-05
    %v1316 = vadd.f32 %v1314, 1e-05
    %v1317 = vrsqrt.pop %v1315
    %v1318 = vrsqrt.pop %v1316
    %v1319 = vmul.f32 %v1303, %v1317
    %v1320 = vmul.f32 %v1304, %v1318
    %v1321 = vlaneseq
    %v1322 = vshrl.u32 %v1321, 7
    %v1323 = vsub.s32 0, %v1322
    %v1324 = vrot.slane %v1292, %v1323
    %v1325 = vmul.f32 %v1319, %v1324
    %v1326 = vmul.f32 %v1320, %v1324
    %v1327 = vlaneseq
    %v1328 = vshrl.u32 %v1327, 7
    %v1329 = vsub.s32 0, %v1328
    %v1330 = vrot.slane %v1293, %v1329
    %v1331 = vadd.f32 %v1325, %v1330
    %v1332 = vadd.f32 %v1326, %v1330
    %v1333 = vadd.f32 %v1331, %v1331
    %v1334 = vadd.f32 %v1332, %v1332
    %v1335 = vld [vmem:[%s6 + $0x3] sm:$0x1]
    %v1336 = vld [vmem:[%s6 + $0x4] sm:$0x1]
    %v1337 = vsel %vm72, %v1333, 0.0
    %1338 = vadd.xlane.f32.xlu0 %v1337
    %v1339 = vpop.xlane.xlu0 %1338
    %v1340 = vsel %vm72, %v1334, 0.0
    %1341 = vadd.xlane.f32.xlu0 %v1340
    %v1342 = vpop.xlane.xlu0 %1341
    %v1343 = vmul.f32 %v1339, %v1300
    %v1344 = vmul.f32 %v1342, %v1300
    %v1345 = vsub.f32 %v1333, %v1343
    %v1346 = vsub.f32 %v1334, %v1344
    %v1347 = vmul.f32 %v1345, %v1345
    %v1348 = vmul.f32 %v1346, %v1346
    %v1349 = vsel %vm72, %v1347, 0.0
    %1350 = vadd.xlane.f32.xlu0 %v1349
    %v1351 = vpop.xlane.xlu0 %1350
    %v1352 = vsel %vm72, %v1348, 0.0
    %1353 = vadd.xlane.f32.xlu0 %v1352
    %v1354 = vpop.xlane.xlu0 %1353
    %v1355 = vmul.f32 %v1351, %v1300
    %v1356 = vmul.f32 %v1354, %v1300
    %v1357 = vadd.f32 %v1355, 1e-05
    %v1358 = vadd.f32 %v1356, 1e-05
    %v1359 = vrsqrt.pop %v1357
    %v1360 = vrsqrt.pop %v1358
    %v1361 = vmul.f32 %v1345, %v1359
    %v1362 = vmul.f32 %v1346, %v1360
    %v1363 = vlaneseq
    %v1364 = vshrl.u32 %v1363, 7
    %v1365 = vsub.s32 0, %v1364
    %v1366 = vrot.slane %v1335, %v1365
    %v1367 = vmul.f32 %v1361, %v1366
    %v1368 = vmul.f32 %v1362, %v1366
    %v1369 = vlaneseq
    %v1370 = vshrl.u32 %v1369, 7
    %v1371 = vsub.s32 0, %v1370
    %v1372 = vrot.slane %v1336, %v1371
    %v1373 = vadd.f32 %v1367, %v1372
    %v1374 = vadd.f32 %v1368, %v1372
    %1375 = vst.msk [vmem:[#allocation2] sm:$0xff] %vm72, %v1373
    %1376 = vst.msk [vmem:[#allocation2 + $0x8] sm:$0xff] %vm72, %v1374
    // Predicated region
    $region30: #{tpu_custom_call.1} parent=1 // pred_check
      _
    $region31: #{tpu_custom_call.1} parent=1 // pred_check_branch
      %1378 = sbr.rel (0) target = $region33
    $region32: #{tpu_custom_call.1} parent=1 // pred_region
      %s1380 = ssub.s32 256, 256
      %1381 = vsyncadd [#allocation3], %s1380
      %s1382 = sshll.u32 [#allocation2], 4
      %s1383 = int_to_ptr.vmem [resolvable:$true] %s1382
      %1388 = dma.vmem_to_hbm [thread:$0]  %s1383, 256, %s7, [#allocation3], 128, 128, 8
    $region33: #{tpu_custom_call.1} parent=1 // pred_fallthru
      _
    // Predicated region
    $region34: #{tpu_custom_call.1} parent=1 // pred_check
      _
    $region35: #{tpu_custom_call.1} parent=1 // pred_check_branch
      %1390 = sbr.rel (0) target = $region37
    $region36: #{tpu_custom_call.1} parent=1 // pred_region
      %1391 = dma.done [#allocation3], 256
    $region37: #{tpu_custom_call.1} parent=1 // pred_fallthru
      _
    %1392 = vsyncpa [#allocation3], 1

</llo_original>
